<compile_context>
chip_gen: v7x
topology: tpu7x:2x2x1
jax: 0.10.0
libtpu: 0.0.40
codegen_flags: <defaults>
</compile_context>

<pallas_src>
import functools

import jax
import jax.numpy as jnp
from jax.experimental import pallas as pl
from jax.experimental.pallas import tpu as pltpu

_SMOOTH = 1e-5
_LANES = 128
_CHUNK_ROWS = 512            # (512, 128) f32 chunk -> ~256 KiB live temporaries
_MAX_BLOCK_ROWS = 8192       # (8192, 128) f32 = 4 MiB/input/buffer -> ~16-18 MiB resident
_VMEM_LIMIT_BYTES = 40 * 1024 * 1024  # > v5e's 16 MiB default scoped limit, < v7x's 64 MiB physical


def _round_up(x, m):
    return (x + m - 1) // m * m


def _dice_partial_kernel(x_ref, t_ref, o_ref, acc_i_ref, acc_d_ref, *,
                         rows_valid, nblocks, blocks_per_part, block_rows,
                         nchunks):
    p = pl.program_id(0)   # parallel part (v7x dual-TC split)
    j = pl.program_id(1)   # reduction step within the part

    @pl.when(j == 0)
    def _init():
        acc_i_ref[...] = jnp.zeros_like(acc_i_ref)
        acc_d_ref[...] = jnp.zeros_like(acc_d_ref)

    blk = p * blocks_per_part + j   # logical (unclamped) block index

    def _accumulate(masked):
        def body(c, carry):
            acc_i, acc_d = carry
            start = pl.multiple_of(c * _CHUNK_ROWS, _CHUNK_ROWS)
            xb = x_ref[pl.ds(start, _CHUNK_ROWS), :].astype(jnp.float32)
            tb = t_ref[pl.ds(start, _CHUNK_ROWS), :].astype(jnp.float32)
            prob = jax.nn.sigmoid(xb)
            if masked:
                # Row-level mask (no int32 flat-index overflow risk): zeroes the
                # OOB rows of the partial edge block and everything in clamped
                # duplicate blocks.  Applied AFTER the sigmoid via select, so
                # NaN/Inf from uninitialized BlockSpec rows are discarded.
                row = (blk * block_rows + start
                       + jax.lax.broadcasted_iota(jnp.int32,
                                                  (_CHUNK_ROWS, _LANES), 0))
                valid = row < rows_valid
                prob = jnp.where(valid, prob, 0.0)
                tb = jnp.where(valid, tb, 0.0)
            # Lane/sublane-wise accumulation into (8, 128) vregs (VPU adds only);
            # the single cross-lane reduction is deferred to finalize.
            acc_i = acc_i + (prob * tb).reshape(-1, 8, _LANES).sum(axis=0)
            acc_d = acc_d + (prob + tb).reshape(-1, 8, _LANES).sum(axis=0)
            return acc_i, acc_d

        acc_i, acc_d = jax.lax.fori_loop(0, nchunks, body,
                                         (acc_i_ref[...], acc_d_ref[...]))
        acc_i_ref[...] = acc_i
        acc_d_ref[...] = acc_d

    # Fast path: interior blocks accumulate completely unmasked; only the edge
    # block (and any clamped duplicates, blk >= nblocks) pays for the mask.
    @pl.when(blk < nblocks - 1)
    def _fast():
        _accumulate(masked=False)

    @pl.when(blk >= nblocks - 1)
    def _slow():
        _accumulate(masked=True)

    @pl.when(j == pl.num_programs(1) - 1)
    def _finalize():
        o_ref[0, 0] = jnp.sum(acc_i_ref[...])   # partial sum(sigmoid(x) * t)
        o_ref[0, 1] = jnp.sum(acc_d_ref[...])   # partial sum(sigmoid(x) + t)


def dice_loss(inputs, targets, smooth=_SMOOTH):
    """Pallas TPU implementation of DiceLoss.forward (returns scalar loss)."""
    x = jnp.ravel(inputs)
    t = jnp.ravel(targets)
    n = x.shape[0]

    rows = n // _LANES
    n_main = rows * _LANES

    # <128-element ragged tail: fold into the partial sums with a tiny jnp
    # reduction instead of padding/copying both full arrays in HBM.
    tail_i = jnp.float32(0.0)
    tail_d = jnp.float32(0.0)
    if n_main != n:
        xt = x[n_main:].astype(jnp.float32)
        tt = t[n_main:].astype(jnp.float32)
        pt = jax.nn.sigmoid(xt)
        tail_i = jnp.sum(pt * tt)
        tail_d = jnp.sum(pt) + jnp.sum(tt)

    if rows == 0:
        intersection = tail_i
        denom = tail_d
    else:
        # Copy-free lane-dense slab for the divisible prefix, kept in the input
        # dtype (kernel upcasts per chunk), so bf16 logits / narrow targets cut
        # HBM traffic on this bandwidth-bound reduction.
        x2 = x[:n_main].reshape(rows, _LANES)
        t2 = t[:n_main].reshape(rows, _LANES)

        block_rows = min(_MAX_BLOCK_ROWS, _round_up(rows, _CHUNK_ROWS))
        nchunks = block_rows // _CHUNK_ROWS
        nblocks = pl.cdiv(rows, block_rows)

        # Leading "parallel" axis: independent partial reductions (up to 2x on
        # v7x's two TensorCores; trivial outer loop on single-TC v5e/v6e).
        # TODO(synk): confirm Mosaic shards the plain "parallel" axis across
        # TensorCores on v7x; otherwise switch to pltpu.CORE_PARALLEL.
        num_parts = 2 if nblocks >= 2 else 1
        blocks_per_part = pl.cdiv(nblocks, num_parts)

        def in_map(p, j):
            # Clamp so the DMA never targets a block fully outside the array;
            # the in-kernel row mask zeroes any clamped/duplicated block.
            return (jnp.minimum(p * blocks_per_part + j, nblocks - 1), 0)

        kernel = functools.partial(
            _dice_partial_kernel,
            rows_valid=rows,
            nblocks=nblocks,
            blocks_per_part=blocks_per_part,
            block_rows=block_rows,
            nchunks=nchunks,
        )

        partials = pl.pallas_call(
            kernel,
            out_shape=jax.ShapeDtypeStruct((num_parts, 2), jnp.float32),
            grid_spec=pltpu.PrefetchScalarGridSpec(
                num_scalar_prefetch=0,
                grid=(num_parts, blocks_per_part),
                in_specs=[
                    pl.BlockSpec((block_rows, _LANES), in_map),
                    pl.BlockSpec((block_rows, _LANES), in_map),
                ],
                out_specs=pl.BlockSpec(
                    (1, 2), lambda p, j: (p, 0),
                    memory_space=pltpu.MemorySpace.SMEM),
                scratch_shapes=[
                    pltpu.VMEM((8, _LANES), jnp.float32),  # intersection acc
                    pltpu.VMEM((8, _LANES), jnp.float32),  # denominator acc
                ],
            ),
            compiler_params=pltpu.CompilerParams(
                dimension_semantics=("parallel", "arbitrary"),
                vmem_limit_bytes=_VMEM_LIMIT_BYTES),
        )(x2, t2)

        intersection = jnp.sum(partials[:, 0]) + tail_i
        denom = jnp.sum(partials[:, 1]) + tail_d

    return 1.0 - (2.0 * intersection + smooth) / (denom + smooth)


def _dice_loss_ref(inputs, targets, smooth=_SMOOTH):
    p = jax.nn.sigmoid(inputs.astype(jnp.float32)).ravel()
    t = targets.astype(jnp.float32).ravel()
    inter = jnp.sum(p * t)
    d = (2.0 * inter + smooth) / (jnp.sum(p) + jnp.sum(t) + smooth)
    return 1.0 - d


if __name__ == "__main__":
    key = jax.random.PRNGKey(0)

    # Primary case: NCHW logits + binary mask (matches the PyTorch module use).
    k1, k2 = jax.random.split(key)
    x = jax.random.normal(k1, (2, 4, 16, 16), dtype=jnp.float32)
    t = (jax.random.uniform(k2, (2, 4, 16, 16)) > 0.5).astype(jnp.float32)
    loss = dice_loss(x, t)
    jax.block_until_ready(loss)
    ref = _dice_loss_ref(x, t)
    assert jnp.allclose(loss, ref, rtol=1e-5, atol=1e-6), (loss, ref)

    # Tail-masking case (n % 128 != 0 -> ragged tail handled in the wrapper).
    k3, k4 = jax.random.split(k1)
    x_odd = jax.random.normal(k3, (2, 3, 17, 19), dtype=jnp.float32)
    t_odd = (jax.random.uniform(k4, (2, 3, 17, 19)) > 0.5).astype(jnp.float32)
    loss_odd = dice_loss(x_odd, t_odd)
    jax.block_until_ready(loss_odd)
    ref_odd = _dice_loss_ref(x_odd, t_odd)
    assert jnp.allclose(loss_odd, ref_odd, rtol=1e-5, atol=1e-6), (loss_odd, ref_odd)

    # Narrow-dtype logits (bf16 traffic halved; kernel computes in f32).
    x_bf16 = x.astype(jnp.bfloat16)
    loss_bf16 = dice_loss(x_bf16, t)
    jax.block_until_ready(loss_bf16)
    ref_bf16 = _dice_loss_ref(x_bf16, t)
    assert jnp.allclose(loss_bf16, ref_bf16, rtol=1e-5, atol=1e-6), (loss_bf16, ref_bf16)

    # Multi-block / dual-part case: 3,145,728 elems -> 3 blocks of 8192 rows,
    # exercises the parallel split, the unmasked fast path and the clamped
    # duplicate block on part 1.
    k5, k6 = jax.random.split(k2)
    x_big = jax.random.normal(k5, (6, 4, 256, 512), dtype=jnp.float32)
    t_big = (jax.random.uniform(k6, (6, 4, 256, 512)) > 0.5).astype(jnp.float32)
    loss_big = dice_loss(x_big, t_big)
    jax.block_until_ready(loss_big)
    ref_big = _dice_loss_ref(x_big, t_big)
    assert jnp.allclose(loss_big, ref_big, rtol=1e-4, atol=1e-5), (loss_big, ref_big)

    print("KERNEL_OK")
</pallas_src>

<mosaic_0001>
module attributes {stable_mosaic.version = 11 : i64} {
  func.func @_dice_partial_kernel(%arg0: i32, %arg1: i32, %arg2: memref<512x128xf32, #tpu.memory_space<vmem>>, %arg3: memref<512x128xf32, #tpu.memory_space<vmem>>, %arg4: memref<1x2xf32, #tpu.memory_space<smem>>, %arg5: memref<8x128xf32, #tpu.memory_space<vmem>>, %arg6: memref<8x128xf32, #tpu.memory_space<vmem>>) attributes {dimension_semantics = [#tpu.dimension_semantics<parallel>, #tpu.dimension_semantics<arbitrary>], iteration_bounds = array<i64: 1, 1>, scalar_prefetch = 0 : i64, scratch_operands = 2 : i64, tpu.core_type = #tpu.core_type<tc>, window_params = [{transform_indices = @transform_0, window_bounds = array<i64: 512, 128>}, {transform_indices = @transform_1, window_bounds = array<i64: 512, 128>}, {transform_indices = @transform_2, window_bounds = array<i64: 1, 2>}]} {
    %c0_i32 = arith.constant 0 : i32
    %0 = arith.cmpi eq, %arg1, %c0_i32 : i32
    %1 = arith.extui %0 : i1 to i32
    %c0_i32_0 = arith.constant 0 : i32
    %2 = arith.cmpi ne, %1, %c0_i32_0 : i32
    scf.if %2 {
      %cst = arith.constant 0.000000e+00 : f32
      %14 = vector.broadcast %cst : f32 to vector<8x128xf32>
      %c0 = arith.constant 0 : index
      %c0_7 = arith.constant 0 : index
      %15 = vector.load %arg5[%c0, %c0_7] : memref<8x128xf32, #tpu.memory_space<vmem>>, vector<8x128xf32>
      tpu.vector_store %arg5[%c0, %c0_7], %14 {strides = array<i32>} : memref<8x128xf32, #tpu.memory_space<vmem>>, vector<8x128xf32>,
      %cst_8 = arith.constant 0.000000e+00 : f32
      %16 = vector.broadcast %cst_8 : f32 to vector<8x128xf32>
      %c0_9 = arith.constant 0 : index
      %c0_10 = arith.constant 0 : index
      %17 = vector.load %arg6[%c0_9, %c0_10] : memref<8x128xf32, #tpu.memory_space<vmem>>, vector<8x128xf32>
      tpu.vector_store %arg6[%c0_9, %c0_10], %16 {strides = array<i32>} : memref<8x128xf32, #tpu.memory_space<vmem>>, vector<8x128xf32>,
    } else {
    }
    %c1_i32 = arith.constant 1 : i32
    %3 = arith.muli %arg0, %c1_i32 : i32
    %4 = arith.addi %3, %arg1 : i32
    %c0_i32_1 = arith.constant 0 : i32
    %5 = arith.cmpi slt, %4, %c0_i32_1 : i32
    %6 = arith.extui %5 : i1 to i32
    %c0_i32_2 = arith.constant 0 : i32
    %7 = arith.cmpi ne, %6, %c0_i32_2 : i32
    scf.if %7 {
      %c0 = arith.constant 0 : index
      %c0_7 = arith.constant 0 : index
      %14 = vector.load %arg5[%c0, %c0_7] : memref<8x128xf32, #tpu.memory_space<vmem>>, vector<8x128xf32>
      %c0_8 = arith.constant 0 : index
      %c0_9 = arith.constant 0 : index
      %15 = vector.load %arg6[%c0_8, %c0_9] : memref<8x128xf32, #tpu.memory_space<vmem>>, vector<8x128xf32>
      %c0_i32_10 = arith.constant 0 : i32
      %c512_i32 = arith.constant 512 : i32
      %16 = arith.muli %c0_i32_10, %c512_i32 : i32
      %17 = tpu.assume_multiple %16, 512 : i32
      %18 = arith.index_cast %17 : i32 to index
      %c0_11 = arith.constant 0 : index
      %19 = vector.load %arg2[%18, %c0_11] : memref<512x128xf32, #tpu.memory_space<vmem>>, vector<512x128xf32>
      %20 = arith.index_cast %17 : i32 to index
      %c0_12 = arith.constant 0 : index
      %21 = vector.load %arg3[%20, %c0_12] : memref<512x128xf32, #tpu.memory_space<vmem>>, vector<512x128xf32>
      %22 = arith.negf %19 : vector<512x128xf32>
      %23 = math.exp %22 : vector<512x128xf32>
      %cst = arith.constant 1.000000e+00 : f32
      %24 = vector.broadcast %cst : f32 to vector<512x128xf32>
      %25 = arith.addf %24, %23 : vector<512x128xf32>
      %26 = arith.divf %24, %25 : vector<512x128xf32>
      %27 = arith.mulf %26, %21 : vector<512x128xf32>
      %28 = vector.shape_cast %27 : vector<512x128xf32> to vector<64x8x128xf32>
      %cst_13 = arith.constant dense<0.000000e+00> : vector<8x128xf32>
      %29 = vector.multi_reduction <add>, %28, %cst_13 [0] : vector<64x8x128xf32> to vector<8x128xf32>
      %30 = arith.addf %14, %29 : vector<8x128xf32>
      %31 = arith.addf %26, %21 : vector<512x128xf32>
      %32 = vector.shape_cast %31 : vector<512x128xf32> to vector<64x8x128xf32>
      %cst_14 = arith.constant dense<0.000000e+00> : vector<8x128xf32>
      %33 = vector.multi_reduction <add>, %32, %cst_14 [0] : vector<64x8x128xf32> to vector<8x128xf32>
      %34 = arith.addf %15, %33 : vector<8x128xf32>
      %c1_i32_15 = arith.constant 1 : i32
      %c0_16 = arith.constant 0 : index
      %c0_17 = arith.constant 0 : index
      %35 = vector.load %arg5[%c0_16, %c0_17] : memref<8x128xf32, #tpu.memory_space<vmem>>, vector<8x128xf32>
      tpu.vector_store %arg5[%c0_16, %c0_17], %30 {strides = array<i32>} : memref<8x128xf32, #tpu.memory_space<vmem>>, vector<8x128xf32>,
      %c0_18 = arith.constant 0 : index
      %c0_19 = arith.constant 0 : index
      %36 = vector.load %arg6[%c0_18, %c0_19] : memref<8x128xf32, #tpu.memory_space<vmem>>, vector<8x128xf32>
      tpu.vector_store %arg6[%c0_18, %c0_19], %34 {strides = array<i32>} : memref<8x128xf32, #tpu.memory_space<vmem>>, vector<8x128xf32>,
    } else {
    }
    %c0_i32_3 = arith.constant 0 : i32
    %8 = arith.cmpi sge, %4, %c0_i32_3 : i32
    %9 = arith.extui %8 : i1 to i32
    %c0_i32_4 = arith.constant 0 : i32
    %10 = arith.cmpi ne, %9, %c0_i32_4 : i32
    scf.if %10 {
      %c0 = arith.constant 0 : index
      %c0_7 = arith.constant 0 : index
      %14 = vector.load %arg5[%c0, %c0_7] : memref<8x128xf32, #tpu.memory_space<vmem>>, vector<8x128xf32>
      %c0_8 = arith.constant 0 : index
      %c0_9 = arith.constant 0 : index
      %15 = vector.load %arg6[%c0_8, %c0_9] : memref<8x128xf32, #tpu.memory_space<vmem>>, vector<8x128xf32>
      %c0_i32_10 = arith.constant 0 : i32
      %c512_i32 = arith.constant 512 : i32
      %16 = arith.muli %c0_i32_10, %c512_i32 : i32
      %17 = tpu.assume_multiple %16, 512 : i32
      %18 = arith.index_cast %17 : i32 to index
      %c0_11 = arith.constant 0 : index
      %19 = vector.load %arg2[%18, %c0_11] : memref<512x128xf32, #tpu.memory_space<vmem>>, vector<512x128xf32>
      %20 = arith.index_cast %17 : i32 to index
      %c0_12 = arith.constant 0 : index
      %21 = vector.load %arg3[%20, %c0_12] : memref<512x128xf32, #tpu.memory_space<vmem>>, vector<512x128xf32>
      %22 = arith.negf %19 : vector<512x128xf32>
      %23 = math.exp %22 : vector<512x128xf32>
      %cst = arith.constant 1.000000e+00 : f32
      %24 = vector.broadcast %cst : f32 to vector<512x128xf32>
      %25 = arith.addf %24, %23 : vector<512x128xf32>
      %26 = arith.divf %24, %25 : vector<512x128xf32>
      %c512_i32_13 = arith.constant 512 : i32
      %27 = arith.muli %4, %c512_i32_13 : i32
      %28 = arith.addi %27, %17 : i32
      %29 = tpu.iota {dimensions = array<i32: 0>} : vector<512x128xi32>
      %30 = vector.broadcast %28 : i32 to vector<512x128xi32>
      %31 = arith.addi %30, %29 : vector<512x128xi32>
      %c16_i32 = arith.constant 16 : i32
      %32 = vector.broadcast %c16_i32 : i32 to vector<512x128xi32>
      %33 = arith.cmpi slt, %31, %32 : vector<512x128xi32>
      %cst_14 = arith.constant 0.000000e+00 : f32
      %34 = vector.broadcast %cst_14 : f32 to vector<512x128xf32>
      %35 = arith.select %33, %26, %34 : vector<512x128xi1>, vector<512x128xf32>
      %cst_15 = arith.constant 0.000000e+00 : f32
      %36 = vector.broadcast %cst_15 : f32 to vector<512x128xf32>
      %37 = arith.select %33, %21, %36 : vector<512x128xi1>, vector<512x128xf32>
      %38 = arith.mulf %35, %37 : vector<512x128xf32>
      %39 = vector.shape_cast %38 : vector<512x128xf32> to vector<64x8x128xf32>
      %cst_16 = arith.constant dense<0.000000e+00> : vector<8x128xf32>
      %40 = vector.multi_reduction <add>, %39, %cst_16 [0] : vector<64x8x128xf32> to vector<8x128xf32>
      %41 = arith.addf %14, %40 : vector<8x128xf32>
      %42 = arith.addf %35, %37 : vector<512x128xf32>
      %43 = vector.shape_cast %42 : vector<512x128xf32> to vector<64x8x128xf32>
      %cst_17 = arith.constant dense<0.000000e+00> : vector<8x128xf32>
      %44 = vector.multi_reduction <add>, %43, %cst_17 [0] : vector<64x8x128xf32> to vector<8x128xf32>
      %45 = arith.addf %15, %44 : vector<8x128xf32>
      %c1_i32_18 = arith.constant 1 : i32
      %c0_19 = arith.constant 0 : index
      %c0_20 = arith.constant 0 : index
      %46 = vector.load %arg5[%c0_19, %c0_20] : memref<8x128xf32, #tpu.memory_space<vmem>>, vector<8x128xf32>
      tpu.vector_store %arg5[%c0_19, %c0_20], %41 {strides = array<i32>} : memref<8x128xf32, #tpu.memory_space<vmem>>, vector<8x128xf32>,
      %c0_21 = arith.constant 0 : index
      %c0_22 = arith.constant 0 : index
      %47 = vector.load %arg6[%c0_21, %c0_22] : memref<8x128xf32, #tpu.memory_space<vmem>>, vector<8x128xf32>
      tpu.vector_store %arg6[%c0_21, %c0_22], %45 {strides = array<i32>} : memref<8x128xf32, #tpu.memory_space<vmem>>, vector<8x128xf32>,
    } else {
    }
    %c0_i32_5 = arith.constant 0 : i32
    %11 = arith.cmpi eq, %arg1, %c0_i32_5 : i32
    %12 = arith.extui %11 : i1 to i32
    %c0_i32_6 = arith.constant 0 : i32
    %13 = arith.cmpi ne, %12, %c0_i32_6 : i32
    scf.if %13 {
      %c0 = arith.constant 0 : index
      %c0_7 = arith.constant 0 : index
      %14 = vector.load %arg5[%c0, %c0_7] : memref<8x128xf32, #tpu.memory_space<vmem>>, vector<8x128xf32>
      %15 = vector.shape_cast %14 : vector<8x128xf32> to vector<1x8x128xf32>
      %cst = arith.constant dense<0.000000e+00> : vector<1xf32>
      %16 = vector.multi_reduction <add>, %15, %cst [1, 2] : vector<1x8x128xf32> to vector<1xf32>
      %17 = vector.shape_cast %16 : vector<1xf32> to vector<1x1x1xf32>
      %18 = vector.extract %17[0, 0, 0] : f32 from vector<1x1x1xf32>
      %c0_8 = arith.constant 0 : index
      %c0_9 = arith.constant 0 : index
      %19 = memref.load %arg4[%c0_8, %c0_9] : memref<1x2xf32, #tpu.memory_space<smem>>
      memref.store %18, %arg4[%c0_8, %c0_9] : memref<1x2xf32, #tpu.memory_space<smem>>
      %c0_10 = arith.constant 0 : index
      %c0_11 = arith.constant 0 : index
      %20 = vector.load %arg6[%c0_10, %c0_11] : memref<8x128xf32, #tpu.memory_space<vmem>>, vector<8x128xf32>
      %21 = vector.shape_cast %20 : vector<8x128xf32> to vector<1x8x128xf32>
      %cst_12 = arith.constant dense<0.000000e+00> : vector<1xf32>
      %22 = vector.multi_reduction <add>, %21, %cst_12 [1, 2] : vector<1x8x128xf32> to vector<1xf32>
      %23 = vector.shape_cast %22 : vector<1xf32> to vector<1x1x1xf32>
      %24 = vector.extract %23[0, 0, 0] : f32 from vector<1x1x1xf32>
      %c0_13 = arith.constant 0 : index
      %c1 = arith.constant 1 : index
      %25 = memref.load %arg4[%c0_13, %c1] : memref<1x2xf32, #tpu.memory_space<smem>>
      memref.store %24, %arg4[%c0_13, %c1] : memref<1x2xf32, #tpu.memory_space<smem>>
    } else {
    }
    return
  }
  func.func @transform_0(%arg0: i32, %arg1: i32) -> (i32, i32) {
    %c1_i32 = arith.constant 1 : i32
    %0 = arith.muli %arg0, %c1_i32 : i32
    %1 = arith.addi %0, %arg1 : i32
    %c0_i32 = arith.constant 0 : i32
    %2 = arith.minsi %1, %c0_i32 : i32
    %c0_i32_0 = arith.constant 0 : i32
    %c0_i32_1 = arith.constant 0 : i32
    return %2, %c0_i32_0 : i32, i32
  }
  func.func @transform_1(%arg0: i32, %arg1: i32) -> (i32, i32) {
    %c1_i32 = arith.constant 1 : i32
    %0 = arith.muli %arg0, %c1_i32 : i32
    %1 = arith.addi %0, %arg1 : i32
    %c0_i32 = arith.constant 0 : i32
    %2 = arith.minsi %1, %c0_i32 : i32
    %c0_i32_0 = arith.constant 0 : i32
    %c0_i32_1 = arith.constant 0 : i32
    return %2, %c0_i32_0 : i32, i32
  }
  func.func @transform_2(%arg0: i32, %arg1: i32) -> (i32, i32) {
    %c0_i32 = arith.constant 0 : i32
    %c0_i32_0 = arith.constant 0 : i32
    return %arg0, %c0_i32 : i32, i32
  }
}

</mosaic_0001>

<llo_original>
// kernel: tpu_custom_call.1
$region0: #{tpu_custom_call.1}
  #allocation0 [shape = 'u32[]', space=smem, size = 0x4, offset = 0x4, fixed_abs, tag = 'smem constant byte address 0x4 - core index']
  #allocation1 [shape = 'u32[144,128]{1,0:T(1,128)}', space=vmem, size = 0x12000, scoped, tag = 'internal scratch']
  #allocation2 [shape = 'f32[8,128]{1,0:T(8,128)}', space=vmem, size = 0x1000, scoped, tag = 'scratch operand']
  #allocation3 [shape = 'f32[8,128]{1,0:T(8,128)}', space=vmem, size = 0x1000, scoped, tag = 'scratch operand']
  %s0 = inlined_call_operand.hbm [shape: f32[16,128], index: 0, kind: input, shape index: {}]
  %s1 = inlined_call_operand.hbm [shape: f32[16,128], index: 1, kind: input, shape index: {}]
  %s2 = inlined_call_operand.hbm [shape: f32[1,2], index: 2, kind: output, shape index: {}]
  %s3 = sld [smem:[#allocation0]]
  $region42: #{tpu_custom_call.1} parent=0
    _
  %s5 = ssub.s32 1, %s3
  %s6 = scalar_select 0, %s5, %s3
  $region1: #{tpu_custom_call.1} parent=0
    #allocation4 [shape = 'u8[262144]{0}', space=vmem, size = 0x40000, scoped, tag = 'input window, operand 0, single buffered']
    #allocation5 [shape = 's32[1]{0}', space=sflag, size = 0x4, scoped, tag = 'scoped memory for tpu_custom_call.1']
    #allocation6 [shape = 's32[1]{0}', space=sflag, size = 0x4, scoped, tag = 'scoped memory for tpu_custom_call.1']
    #allocation7 [shape = 'u8[262144]{0}', space=vmem, size = 0x40000, scoped, tag = 'input window, operand 1, single buffered']
    #allocation8 [shape = 's32[1]{0}', space=sflag, size = 0x4, scoped, tag = 'scoped memory for tpu_custom_call.1']
    #allocation9 [shape = 'u8[512]{0}', space=smem, size = 0x200, scoped, tag = 'output window, operand 0, single buffered']
    %7 = vsyncpa [#allocation5], 0
    %8 = vsyncpa [#allocation8], 0
    %9 = vsyncpa [#allocation6], 0
    // Predicated region
    $region2: #{tpu_custom_call.1} parent=1 // pred_check
      _
    $region3: #{tpu_custom_call.1} parent=1 // pred_check_branch
      %11 = sbr.rel (0) target = $region5
    $region4: #{tpu_custom_call.1} parent=1 // pred_region
      %s12 = sadd.s32 0, 0
      %p13 = scmp.lt.s32.totalorder %s12, 0
      %s14 = scalar_select %p13, %s12, 0
      %s15 = smul.u32 64, %s14
      %s16 = ssub.s32 2, %s15
      %s17 = smul.u32 128, %s16
      %s19 = ssub.s32 8192, %s17
      %20 = vsyncadd [#allocation5], %s19
      %p21 = scmp.ne.s32.totalorder 0, %s17
      %s22 = smul.addr %s15, 128
      %s23 = scalar_lea.hbm %s0, %s22
      %s24 = smul.u32 8, %s16
      %s25 = sshll.u32 [#allocation4], 4
      %s26 = int_to_ptr.vmem [resolvable:$true] %s25
      %s27 = sshll.u32 %s24, 4
      %31 = dma.hbm_to_vmem [thread:$0]  (%p21), %s23, %s27, %s26, [#allocation5], 128, 128, 8
    $region5: #{tpu_custom_call.1} parent=1 // pred_fallthru
      _
    // Predicated region
    $region6: #{tpu_custom_call.1} parent=1 // pred_check
      _
    $region7: #{tpu_custom_call.1} parent=1 // pred_check_branch
      %33 = sbr.rel (0) target = $region9
    $region8: #{tpu_custom_call.1} parent=1 // pred_region
      %s34 = sadd.s32 0, 0
      %p35 = scmp.lt.s32.totalorder %s34, 0
      %s36 = scalar_select %p35, %s34, 0
      %s37 = smul.u32 64, %s36
      %s38 = ssub.s32 2, %s37
      %s39 = smul.u32 128, %s38
      %s41 = ssub.s32 8192, %s39
      %42 = vsyncadd [#allocation8], %s41
      %p43 = scmp.ne.s32.totalorder 0, %s39
      %s44 = smul.addr %s37, 128
      %s45 = scalar_lea.hbm %s1, %s44
      %s46 = smul.u32 8, %s38
      %s47 = sshll.u32 [#allocation7], 4
      %s48 = int_to_ptr.vmem [resolvable:$true] %s47
      %s49 = sshll.u32 %s46, 4
      %53 = dma.hbm_to_vmem [thread:$0]  (%p43), %s45, %s49, %s48, [#allocation8], 128, 128, 8
    $region9: #{tpu_custom_call.1} parent=1 // pred_fallthru
      _
    // Predicated region
    $region10: #{tpu_custom_call.1} parent=1 // pred_check
      _
    $region11: #{tpu_custom_call.1} parent=1 // pred_check_branch
      %55 = sbr.rel (0) target = $region13
    $region12: #{tpu_custom_call.1} parent=1 // pred_region
      %56 = dma.done [#allocation5], 8192
    $region13: #{tpu_custom_call.1} parent=1 // pred_fallthru
      _
    // Predicated region
    $region14: #{tpu_custom_call.1} parent=1 // pred_check
      _
    $region15: #{tpu_custom_call.1} parent=1 // pred_check_branch
      %58 = sbr.rel (0) target = $region17
    $region16: #{tpu_custom_call.1} parent=1 // pred_region
      %59 = dma.done [#allocation8], 8192
    $region17: #{tpu_custom_call.1} parent=1 // pred_fallthru
      _
    %s60 = sadd.s32 0, 0
    %p61 = scmp.lt.s32.totalorder %s60, 0
    %s62 = scalar_select %p61, %s60, 0
    %s63 = smul.u32 64, %s62
    %s64 = ssub.s32 2, %s63
    %s65 = smul.u32 128, %s64
    %s66 = sadd.s32 0, 0
    %p67 = scmp.lt.s32.totalorder %s66, 0
    %s68 = scalar_select %p67, %s66, 0
    %s69 = smul.u32 64, %s68
    %s70 = ssub.s32 2, %s69
    %s71 = smul.u32 128, %s70
    %p72 = scmp.eq.s32.totalorder 0, 0
    // Predicated region
    $region18: #{tpu_custom_call.1} parent=1 // pred_check
      %p73 = pneg %p72
    $region19: #{tpu_custom_call.1} parent=1 // pred_check_branch
      %75 = sbr.rel (%p73) target = $region21
    $region20: #{tpu_custom_call.1} parent=1 // pred_region
      %76 = vst [vmem:[#allocation2] sm:$0xff] 0.0
      %77 = vst [vmem:[#allocation3] sm:$0xff] 0.0
    $region21: #{tpu_custom_call.1} parent=1 // pred_fallthru
      _
    %s78 = sadd.s32 0, 0
    %p79 = scmp.lt.s32.totalorder %s78, 0
    // Predicated region
    $region22: #{tpu_custom_call.1} parent=1 // pred_check
      %p80 = pneg %p79
    $region23: #{tpu_custom_call.1} parent=1 // pred_check_branch
      %82 = sbr.rel (%p80) target = $region25
    $region24: #{tpu_custom_call.1} parent=1 // pred_region
      %v83 = vld [vmem:[#allocation2] sm:$0xff]
      %v84 = vld [vmem:[#allocation3] sm:$0xff]
      %v85 = vld [vmem:[#allocation4] sm:$0xff]
      %v86 = vld [vmem:[#allocation4 + $0x8] sm:$0xff]
      %v87 = vld [vmem:[#allocation4 + $0x10] sm:$0xff]
      %v88 = vld [vmem:[#allocation4 + $0x18] sm:$0xff]
      %v89 = vld [vmem:[#allocation4 + $0x20] sm:$0xff]
      %v90 = vld [vmem:[#allocation4 + $0x28] sm:$0xff]
      %v91 = vld [vmem:[#allocation4 + $0x30] sm:$0xff]
      %v92 = vld [vmem:[#allocation4 + $0x38] sm:$0xff]
      %v93 = vld [vmem:[#allocation4 + $0x40] sm:$0xff]
      %v94 = vld [vmem:[#allocation4 + $0x48] sm:$0xff]
      %v95 = vld [vmem:[#allocation4 + $0x50] sm:$0xff]
      %v96 = vld [vmem:[#allocation4 + $0x58] sm:$0xff]
      %v97 = vld [vmem:[#allocation4 + $0x60] sm:$0xff]
      %v98 = vld [vmem:[#allocation4 + $0x68] sm:$0xff]
      %v99 = vld [vmem:[#allocation4 + $0x70] sm:$0xff]
      %v100 = vld [vmem:[#allocation4 + $0x78] sm:$0xff]
      %v101 = vld [vmem:[#allocation4 + $0x80] sm:$0xff]
      %v102 = vld [vmem:[#allocation4 + $0x88] sm:$0xff]
      %v103 = vld [vmem:[#allocation4 + $0x90] sm:$0xff]
      %v104 = vld [vmem:[#allocation4 + $0x98] sm:$0xff]
      %v105 = vld [vmem:[#allocation4 + $0xa0] sm:$0xff]
      %v106 = vld [vmem:[#allocation4 + $0xa8] sm:$0xff]
      %v107 = vld [vmem:[#allocation4 + $0xb0] sm:$0xff]
      %v108 = vld [vmem:[#allocation4 + $0xb8] sm:$0xff]
      %v109 = vld [vmem:[#allocation4 + $0xc0] sm:$0xff]
      %v110 = vld [vmem:[#allocation4 + $0xc8] sm:$0xff]
      %v111 = vld [vmem:[#allocation4 + $0xd0] sm:$0xff]
      %v112 = vld [vmem:[#allocation4 + $0xd8] sm:$0xff]
      %v113 = vld [vmem:[#allocation4 + $0xe0] sm:$0xff]
      %v114 = vld [vmem:[#allocation4 + $0xe8] sm:$0xff]
      %v115 = vld [vmem:[#allocation4 + $0xf0] sm:$0xff]
      %v116 = vld [vmem:[#allocation4 + $0xf8] sm:$0xff]
      %v117 = vld [vmem:[#allocation4 + $0x100] sm:$0xff]
      %v118 = vld [vmem:[#allocation4 + $0x108] sm:$0xff]
      %v119 = vld [vmem:[#allocation4 + $0x110] sm:$0xff]
      %v120 = vld [vmem:[#allocation4 + $0x118] sm:$0xff]
      %v121 = vld [vmem:[#allocation4 + $0x120] sm:$0xff]
      %v122 = vld [vmem:[#allocation4 + $0x128] sm:$0xff]
      %v123 = vld [vmem:[#allocation4 + $0x130] sm:$0xff]
      %v124 = vld [vmem:[#allocation4 + $0x138] sm:$0xff]
      %v125 = vld [vmem:[#allocation4 + $0x140] sm:$0xff]
      %v126 = vld [vmem:[#allocation4 + $0x148] sm:$0xff]
      %v127 = vld [vmem:[#allocation4 + $0x150] sm:$0xff]
      %v128 = vld [vmem:[#allocation4 + $0x158] sm:$0xff]
      %v129 = vld [vmem:[#allocation4 + $0x160] sm:$0xff]
      %v130 = vld [vmem:[#allocation4 + $0x168] sm:$0xff]
      %v131 = vld [vmem:[#allocation4 + $0x170] sm:$0xff]
      %v132 = vld [vmem:[#allocation4 + $0x178] sm:$0xff]
      %v133 = vld [vmem:[#allocation4 + $0x180] sm:$0xff]
      %v134 = vld [vmem:[#allocation4 + $0x188] sm:$0xff]
      %v135 = vld [vmem:[#allocation4 + $0x190] sm:$0xff]
      %v136 = vld [vmem:[#allocation4 + $0x198] sm:$0xff]
      %v137 = vld [vmem:[#allocation4 + $0x1a0] sm:$0xff]
      %v138 = vld [vmem:[#allocation4 + $0x1a8] sm:$0xff]
      %v139 = vld [vmem:[#allocation4 + $0x1b0] sm:$0xff]
      %v140 = vld [vmem:[#allocation4 + $0x1b8] sm:$0xff]
      %v141 = vld [vmem:[#allocation4 + $0x1c0] sm:$0xff]
      %v142 = vld [vmem:[#allocation4 + $0x1c8] sm:$0xff]
      %v143 = vld [vmem:[#allocation4 + $0x1d0] sm:$0xff]
      %v144 = vld [vmem:[#allocation4 + $0x1d8] sm:$0xff]
      %v145 = vld [vmem:[#allocation4 + $0x1e0] sm:$0xff]
      %v146 = vld [vmem:[#allocation4 + $0x1e8] sm:$0xff]
      %v147 = vld [vmem:[#allocation4 + $0x1f0] sm:$0xff]
      %v148 = vld [vmem:[#allocation4 + $0x1f8] sm:$0xff]
      %v149 = vld [vmem:[#allocation7] sm:$0xff]
      %v150 = vld [vmem:[#allocation7 + $0x8] sm:$0xff]
      %v151 = vld [vmem:[#allocation7 + $0x10] sm:$0xff]
      %v152 = vld [vmem:[#allocation7 + $0x18] sm:$0xff]
      %v153 = vld [vmem:[#allocation7 + $0x20] sm:$0xff]
      %v154 = vld [vmem:[#allocation7 + $0x28] sm:$0xff]
      %v155 = vld [vmem:[#allocation7 + $0x30] sm:$0xff]
      %v156 = vld [vmem:[#allocation7 + $0x38] sm:$0xff]
      %v157 = vld [vmem:[#allocation7 + $0x40] sm:$0xff]
      %v158 = vld [vmem:[#allocation7 + $0x48] sm:$0xff]
      %v159 = vld [vmem:[#allocation7 + $0x50] sm:$0xff]
      %v160 = vld [vmem:[#allocation7 + $0x58] sm:$0xff]
      %v161 = vld [vmem:[#allocation7 + $0x60] sm:$0xff]
      %v162 = vld [vmem:[#allocation7 + $0x68] sm:$0xff]
      %v163 = vld [vmem:[#allocation7 + $0x70] sm:$0xff]
      %v164 = vld [vmem:[#allocation7 + $0x78] sm:$0xff]
      %v165 = vld [vmem:[#allocation7 + $0x80] sm:$0xff]
      %v166 = vld [vmem:[#allocation7 + $0x88] sm:$0xff]
      %v167 = vld [vmem:[#allocation7 + $0x90] sm:$0xff]
      %v168 = vld [vmem:[#allocation7 + $0x98] sm:$0xff]
      %v169 = vld [vmem:[#allocation7 + $0xa0] sm:$0xff]
      %v170 = vld [vmem:[#allocation7 + $0xa8] sm:$0xff]
      %v171 = vld [vmem:[#allocation7 + $0xb0] sm:$0xff]
      %v172 = vld [vmem:[#allocation7 + $0xb8] sm:$0xff]
      %v173 = vld [vmem:[#allocation7 + $0xc0] sm:$0xff]
      %v174 = vld [vmem:[#allocation7 + $0xc8] sm:$0xff]
      %v175 = vld [vmem:[#allocation7 + $0xd0] sm:$0xff]
      %v176 = vld [vmem:[#allocation7 + $0xd8] sm:$0xff]
      %v177 = vld [vmem:[#allocation7 + $0xe0] sm:$0xff]
      %v178 = vld [vmem:[#allocation7 + $0xe8] sm:$0xff]
      %v179 = vld [vmem:[#allocation7 + $0xf0] sm:$0xff]
      %v180 = vld [vmem:[#allocation7 + $0xf8] sm:$0xff]
      %v181 = vld [vmem:[#allocation7 + $0x100] sm:$0xff]
      %v182 = vld [vmem:[#allocation7 + $0x108] sm:$0xff]
      %v183 = vld [vmem:[#allocation7 + $0x110] sm:$0xff]
      %v184 = vld [vmem:[#allocation7 + $0x118] sm:$0xff]
      %v185 = vld [vmem:[#allocation7 + $0x120] sm:$0xff]
      %v186 = vld [vmem:[#allocation7 + $0x128] sm:$0xff]
      %v187 = vld [vmem:[#allocation7 + $0x130] sm:$0xff]
      %v188 = vld [vmem:[#allocation7 + $0x138] sm:$0xff]
      %v189 = vld [vmem:[#allocation7 + $0x140] sm:$0xff]
      %v190 = vld [vmem:[#allocation7 + $0x148] sm:$0xff]
      %v191 = vld [vmem:[#allocation7 + $0x150] sm:$0xff]
      %v192 = vld [vmem:[#allocation7 + $0x158] sm:$0xff]
      %v193 = vld [vmem:[#allocation7 + $0x160] sm:$0xff]
      %v194 = vld [vmem:[#allocation7 + $0x168] sm:$0xff]
      %v195 = vld [vmem:[#allocation7 + $0x170] sm:$0xff]
      %v196 = vld [vmem:[#allocation7 + $0x178] sm:$0xff]
      %v197 = vld [vmem:[#allocation7 + $0x180] sm:$0xff]
      %v198 = vld [vmem:[#allocation7 + $0x188] sm:$0xff]
      %v199 = vld [vmem:[#allocation7 + $0x190] sm:$0xff]
      %v200 = vld [vmem:[#allocation7 + $0x198] sm:$0xff]
      %v201 = vld [vmem:[#allocation7 + $0x1a0] sm:$0xff]
      %v202 = vld [vmem:[#allocation7 + $0x1a8] sm:$0xff]
      %v203 = vld [vmem:[#allocation7 + $0x1b0] sm:$0xff]
      %v204 = vld [vmem:[#allocation7 + $0x1b8] sm:$0xff]
      %v205 = vld [vmem:[#allocation7 + $0x1c0] sm:$0xff]
      %v206 = vld [vmem:[#allocation7 + $0x1c8] sm:$0xff]
      %v207 = vld [vmem:[#allocation7 + $0x1d0] sm:$0xff]
      %v208 = vld [vmem:[#allocation7 + $0x1d8] sm:$0xff]
      %v209 = vld [vmem:[#allocation7 + $0x1e0] sm:$0xff]
      %v210 = vld [vmem:[#allocation7 + $0x1e8] sm:$0xff]
      %v211 = vld [vmem:[#allocation7 + $0x1f0] sm:$0xff]
      %v212 = vld [vmem:[#allocation7 + $0x1f8] sm:$0xff]
      %v213 = vxor.u32 %v85, 2147483648
      %v214 = vxor.u32 %v86, 2147483648
      %v215 = vxor.u32 %v87, 2147483648
      %v216 = vxor.u32 %v88, 2147483648
      %v217 = vxor.u32 %v89, 2147483648
      %v218 = vxor.u32 %v90, 2147483648
      %v219 = vxor.u32 %v91, 2147483648
      %v220 = vxor.u32 %v92, 2147483648
      %v221 = vxor.u32 %v93, 2147483648
      %v222 = vxor.u32 %v94, 2147483648
      %v223 = vxor.u32 %v95, 2147483648
      %v224 = vxor.u32 %v96, 2147483648
      %v225 = vxor.u32 %v97, 2147483648
      %v226 = vxor.u32 %v98, 2147483648
      %v227 = vxor.u32 %v99, 2147483648
      %v228 = vxor.u32 %v100, 2147483648
      %v229 = vxor.u32 %v101, 2147483648
      %v230 = vxor.u32 %v102, 2147483648
      %v231 = vxor.u32 %v103, 2147483648
      %v232 = vxor.u32 %v104, 2147483648
      %v233 = vxor.u32 %v105, 2147483648
      %v234 = vxor.u32 %v106, 2147483648
      %v235 = vxor.u32 %v107, 2147483648
      %v236 = vxor.u32 %v108, 2147483648
      %v237 = vxor.u32 %v109, 2147483648
      %v238 = vxor.u32 %v110, 2147483648
      %v239 = vxor.u32 %v111, 2147483648
      %v240 = vxor.u32 %v112, 2147483648
      %v241 = vxor.u32 %v113, 2147483648
      %v242 = vxor.u32 %v114, 2147483648
      %v243 = vxor.u32 %v115, 2147483648
      %v244 = vxor.u32 %v116, 2147483648
      %v245 = vxor.u32 %v117, 2147483648
      %v246 = vxor.u32 %v118, 2147483648
      %v247 = vxor.u32 %v119, 2147483648
      %v248 = vxor.u32 %v120, 2147483648
      %v249 = vxor.u32 %v121, 2147483648
      %v250 = vxor.u32 %v122, 2147483648
      %v251 = vxor.u32 %v123, 2147483648
      %v252 = vxor.u32 %v124, 2147483648
      %v253 = vxor.u32 %v125, 2147483648
      %v254 = vxor.u32 %v126, 2147483648
      %v255 = vxor.u32 %v127, 2147483648
      %v256 = vxor.u32 %v128, 2147483648
      %v257 = vxor.u32 %v129, 2147483648
      %v258 = vxor.u32 %v130, 2147483648
      %v259 = vxor.u32 %v131, 2147483648
      %v260 = vxor.u32 %v132, 2147483648
      %v261 = vxor.u32 %v133, 2147483648
      %v262 = vxor.u32 %v134, 2147483648
      %v263 = vxor.u32 %v135, 2147483648
      %v264 = vxor.u32 %v136, 2147483648
      %v265 = vxor.u32 %v137, 2147483648
      %v266 = vxor.u32 %v138, 2147483648
      %v267 = vxor.u32 %v139, 2147483648
      %v268 = vxor.u32 %v140, 2147483648
      %v269 = vxor.u32 %v141, 2147483648
      %v270 = vxor.u32 %v142, 2147483648
      %v271 = vxor.u32 %v143, 2147483648
      %v272 = vxor.u32 %v144, 2147483648
      %v273 = vxor.u32 %v145, 2147483648
      %v274 = vxor.u32 %v146, 2147483648
      %v275 = vxor.u32 %v147, 2147483648
      %v276 = vxor.u32 %v148, 2147483648
      %v277 = vmul.f32 %v213, 1.442695
      %v278 = vpow.pop %v277
      %v279 = vmul.f32 %v214, 1.442695
      %v280 = vpow.pop %v279
      %v281 = vmul.f32 %v215, 1.442695
      %v282 = vpow.pop %v281
      %v283 = vmul.f32 %v216, 1.442695
      %v284 = vpow.pop %v283
      %v285 = vmul.f32 %v217, 1.442695
      %v286 = vpow.pop %v285
      %v287 = vmul.f32 %v218, 1.442695
      %v288 = vpow.pop %v287
      %v289 = vmul.f32 %v219, 1.442695
      %v290 = vpow.pop %v289
      %v291 = vmul.f32 %v220, 1.442695
      %v292 = vpow.pop %v291
      %v293 = vmul.f32 %v221, 1.442695
      %v294 = vpow.pop %v293
      %v295 = vmul.f32 %v222, 1.442695
      %v296 = vpow.pop %v295
      %v297 = vmul.f32 %v223, 1.442695
      %v298 = vpow.pop %v297
      %v299 = vmul.f32 %v224, 1.442695
      %v300 = vpow.pop %v299
      %v301 = vmul.f32 %v225, 1.442695
      %v302 = vpow.pop %v301
      %v303 = vmul.f32 %v226, 1.442695
      %v304 = vpow.pop %v303
      %v305 = vmul.f32 %v227, 1.442695
      %v306 = vpow.pop %v305
      %v307 = vmul.f32 %v228, 1.442695
      %v308 = vpow.pop %v307
      %v309 = vmul.f32 %v229, 1.442695
      %v310 = vpow.pop %v309
      %v311 = vmul.f32 %v230, 1.442695
      %v312 = vpow.pop %v311
      %v313 = vmul.f32 %v231, 1.442695
      %v314 = vpow.pop %v313
      %v315 = vmul.f32 %v232, 1.442695
      %v316 = vpow.pop %v315
      %v317 = vmul.f32 %v233, 1.442695
      %v318 = vpow.pop %v317
      %v319 = vmul.f32 %v234, 1.442695
      %v320 = vpow.pop %v319
      %v321 = vmul.f32 %v235, 1.442695
      %v322 = vpow.pop %v321
      %v323 = vmul.f32 %v236, 1.442695
      %v324 = vpow.pop %v323
      %v325 = vmul.f32 %v237, 1.442695
      %v326 = vpow.pop %v325
      %v327 = vmul.f32 %v238, 1.442695
      %v328 = vpow.pop %v327
      %v329 = vmul.f32 %v239, 1.442695
      %v330 = vpow.pop %v329
      %v331 = vmul.f32 %v240, 1.442695
      %v332 = vpow.pop %v331
      %v333 = vmul.f32 %v241, 1.442695
      %v334 = vpow.pop %v333
      %v335 = vmul.f32 %v242, 1.442695
      %v336 = vpow.pop %v335
      %v337 = vmul.f32 %v243, 1.442695
      %v338 = vpow.pop %v337
      %v339 = vmul.f32 %v244, 1.442695
      %v340 = vpow.pop %v339
      %v341 = vmul.f32 %v245, 1.442695
      %v342 = vpow.pop %v341
      %v343 = vmul.f32 %v246, 1.442695
      %v344 = vpow.pop %v343
      %v345 = vmul.f32 %v247, 1.442695
      %v346 = vpow.pop %v345
      %v347 = vmul.f32 %v248, 1.442695
      %v348 = vpow.pop %v347
      %v349 = vmul.f32 %v249, 1.442695
      %v350 = vpow.pop %v349
      %v351 = vmul.f32 %v250, 1.442695
      %v352 = vpow.pop %v351
      %v353 = vmul.f32 %v251, 1.442695
      %v354 = vpow.pop %v353
      %v355 = vmul.f32 %v252, 1.442695
      %v356 = vpow.pop %v355
      %v357 = vmul.f32 %v253, 1.442695
      %v358 = vpow.pop %v357
      %v359 = vmul.f32 %v254, 1.442695
      %v360 = vpow.pop %v359
      %v361 = vmul.f32 %v255, 1.442695
      %v362 = vpow.pop %v361
      %v363 = vmul.f32 %v256, 1.442695
      %v364 = vpow.pop %v363
      %v365 = vmul.f32 %v257, 1.442695
      %v366 = vpow.pop %v365
      %v367 = vmul.f32 %v258, 1.442695
      %v368 = vpow.pop %v367
      %v369 = vmul.f32 %v259, 1.442695
      %v370 = vpow.pop %v369
      %v371 = vmul.f32 %v260, 1.442695
      %v372 = vpow.pop %v371
      %v373 = vmul.f32 %v261, 1.442695
      %v374 = vpow.pop %v373
      %v375 = vmul.f32 %v262, 1.442695
      %v376 = vpow.pop %v375
      %v377 = vmul.f32 %v263, 1.442695
      %v378 = vpow.pop %v377
      %v379 = vmul.f32 %v264, 1.442695
      %v380 = vpow.pop %v379
      %v381 = vmul.f32 %v265, 1.442695
      %v382 = vpow.pop %v381
      %v383 = vmul.f32 %v266, 1.442695
      %v384 = vpow.pop %v383
      %v385 = vmul.f32 %v267, 1.442695
      %v386 = vpow.pop %v385
      %v387 = vmul.f32 %v268, 1.442695
      %v388 = vpow.pop %v387
      %v389 = vmul.f32 %v269, 1.442695
      %v390 = vpow.pop %v389
      %v391 = vmul.f32 %v270, 1.442695
      %v392 = vpow.pop %v391
      %v393 = vmul.f32 %v271, 1.442695
      %v394 = vpow.pop %v393
      %v395 = vmul.f32 %v272, 1.442695
      %v396 = vpow.pop %v395
      %v397 = vmul.f32 %v273, 1.442695
      %v398 = vpow.pop %v397
      %v399 = vmul.f32 %v274, 1.442695
      %v400 = vpow.pop %v399
      %v401 = vmul.f32 %v275, 1.442695
      %v402 = vpow.pop %v401
      %v403 = vmul.f32 %v276, 1.442695
      %v404 = vpow.pop %v403
      %v405 = vadd.f32 %v278, 1.0
      %v406 = vadd.f32 %v280, 1.0
      %v407 = vadd.f32 %v282, 1.0
      %v408 = vadd.f32 %v284, 1.0
      %v409 = vadd.f32 %v286, 1.0
      %v410 = vadd.f32 %v288, 1.0
      %v411 = vadd.f32 %v290, 1.0
      %v412 = vadd.f32 %v292, 1.0
      %v413 = vadd.f32 %v294, 1.0
      %v414 = vadd.f32 %v296, 1.0
      %v415 = vadd.f32 %v298, 1.0
      %v416 = vadd.f32 %v300, 1.0
      %v417 = vadd.f32 %v302, 1.0
      %v418 = vadd.f32 %v304, 1.0
      %v419 = vadd.f32 %v306, 1.0
      %v420 = vadd.f32 %v308, 1.0
      %v421 = vadd.f32 %v310, 1.0
      %v422 = vadd.f32 %v312, 1.0
      %v423 = vadd.f32 %v314, 1.0
      %v424 = vadd.f32 %v316, 1.0
      %v425 = vadd.f32 %v318, 1.0
      %v426 = vadd.f32 %v320, 1.0
      %v427 = vadd.f32 %v322, 1.0
      %v428 = vadd.f32 %v324, 1.0
      %v429 = vadd.f32 %v326, 1.0
      %v430 = vadd.f32 %v328, 1.0
      %v431 = vadd.f32 %v330, 1.0
      %v432 = vadd.f32 %v332, 1.0
      %v433 = vadd.f32 %v334, 1.0
      %v434 = vadd.f32 %v336, 1.0
      %v435 = vadd.f32 %v338, 1.0
      %v436 = vadd.f32 %v340, 1.0
      %v437 = vadd.f32 %v342, 1.0
      %v438 = vadd.f32 %v344, 1.0
      %v439 = vadd.f32 %v346, 1.0
      %v440 = vadd.f32 %v348, 1.0
      %v441 = vadd.f32 %v350, 1.0
      %v442 = vadd.f32 %v352, 1.0
      %v443 = vadd.f32 %v354, 1.0
      %v444 = vadd.f32 %v356, 1.0
      %v445 = vadd.f32 %v358, 1.0
      %v446 = vadd.f32 %v360, 1.0
      %v447 = vadd.f32 %v362, 1.0
      %v448 = vadd.f32 %v364, 1.0
      %v449 = vadd.f32 %v366, 1.0
      %v450 = vadd.f32 %v368, 1.0
      %v451 = vadd.f32 %v370, 1.0
      %v452 = vadd.f32 %v372, 1.0
      %v453 = vadd.f32 %v374, 1.0
      %v454 = vadd.f32 %v376, 1.0
      %v455 = vadd.f32 %v378, 1.0
      %v456 = vadd.f32 %v380, 1.0
      %v457 = vadd.f32 %v382, 1.0
      %v458 = vadd.f32 %v384, 1.0
      %v459 = vadd.f32 %v386, 1.0
      %v460 = vadd.f32 %v388, 1.0
      %v461 = vadd.f32 %v390, 1.0
      %v462 = vadd.f32 %v392, 1.0
      %v463 = vadd.f32 %v394, 1.0
      %v464 = vadd.f32 %v396, 1.0
      %v465 = vadd.f32 %v398, 1.0
      %v466 = vadd.f32 %v400, 1.0
      %v467 = vadd.f32 %v402, 1.0
      %v468 = vadd.f32 %v404, 1.0
      %v469 = vrcp.pop %v405
      %v470 = vmul.f32 1.0, %v469
      %v471 = vrcp.pop %v406
      %v472 = vmul.f32 1.0, %v471
      %v473 = vrcp.pop %v407
      %v474 = vmul.f32 1.0, %v473
      %v475 = vrcp.pop %v408
      %v476 = vmul.f32 1.0, %v475
      %v477 = vrcp.pop %v409
      %v478 = vmul.f32 1.0, %v477
      %v479 = vrcp.pop %v410
      %v480 = vmul.f32 1.0, %v479
      %v481 = vrcp.pop %v411
      %v482 = vmul.f32 1.0, %v481
      %v483 = vrcp.pop %v412
      %v484 = vmul.f32 1.0, %v483
      %v485 = vrcp.pop %v413
      %v486 = vmul.f32 1.0, %v485
      %v487 = vrcp.pop %v414
      %v488 = vmul.f32 1.0, %v487
      %v489 = vrcp.pop %v415
      %v490 = vmul.f32 1.0, %v489
      %v491 = vrcp.pop %v416
      %v492 = vmul.f32 1.0, %v491
      %v493 = vrcp.pop %v417
      %v494 = vmul.f32 1.0, %v493
      %v495 = vrcp.pop %v418
      %v496 = vmul.f32 1.0, %v495
      %v497 = vrcp.pop %v419
      %v498 = vmul.f32 1.0, %v497
      %v499 = vrcp.pop %v420
      %v500 = vmul.f32 1.0, %v499
      %v501 = vrcp.pop %v421
      %v502 = vmul.f32 1.0, %v501
      %v503 = vrcp.pop %v422
      %v504 = vmul.f32 1.0, %v503
      %v505 = vrcp.pop %v423
      %v506 = vmul.f32 1.0, %v505
      %v507 = vrcp.pop %v424
      %v508 = vmul.f32 1.0, %v507
      %v509 = vrcp.pop %v425
      %v510 = vmul.f32 1.0, %v509
      %v511 = vrcp.pop %v426
      %v512 = vmul.f32 1.0, %v511
      %v513 = vrcp.pop %v427
      %v514 = vmul.f32 1.0, %v513
      %v515 = vrcp.pop %v428
      %v516 = vmul.f32 1.0, %v515
      %v517 = vrcp.pop %v429
      %v518 = vmul.f32 1.0, %v517
      %v519 = vrcp.pop %v430
      %v520 = vmul.f32 1.0, %v519
      %v521 = vrcp.pop %v431
      %v522 = vmul.f32 1.0, %v521
      %v523 = vrcp.pop %v432
      %v524 = vmul.f32 1.0, %v523
      %v525 = vrcp.pop %v433
      %v526 = vmul.f32 1.0, %v525
      %v527 = vrcp.pop %v434
      %v528 = vmul.f32 1.0, %v527
      %v529 = vrcp.pop %v435
      %v530 = vmul.f32 1.0, %v529
      %v531 = vrcp.pop %v436
      %v532 = vmul.f32 1.0, %v531
      %v533 = vrcp.pop %v437
      %v534 = vmul.f32 1.0, %v533
      %v535 = vrcp.pop %v438
      %v536 = vmul.f32 1.0, %v535
      %v537 = vrcp.pop %v439
      %v538 = vmul.f32 1.0, %v537
      %v539 = vrcp.pop %v440
      %v540 = vmul.f32 1.0, %v539
      %v541 = vrcp.pop %v441
      %v542 = vmul.f32 1.0, %v541
      %v543 = vrcp.pop %v442
      %v544 = vmul.f32 1.0, %v543
      %v545 = vrcp.pop %v443
      %v546 = vmul.f32 1.0, %v545
      %v547 = vrcp.pop %v444
      %v548 = vmul.f32 1.0, %v547
      %v549 = vrcp.pop %v445
      %v550 = vmul.f32 1.0, %v549
      %v551 = vrcp.pop %v446
      %v552 = vmul.f32 1.0, %v551
      %v553 = vrcp.pop %v447
      %v554 = vmul.f32 1.0, %v553
      %v555 = vrcp.pop %v448
      %v556 = vmul.f32 1.0, %v555
      %v557 = vrcp.pop %v449
      %v558 = vmul.f32 1.0, %v557
      %v559 = vrcp.pop %v450
      %v560 = vmul.f32 1.0, %v559
      %v561 = vrcp.pop %v451
      %v562 = vmul.f32 1.0, %v561
      %v563 = vrcp.pop %v452
      %v564 = vmul.f32 1.0, %v563
      %v565 = vrcp.pop %v453
      %v566 = vmul.f32 1.0, %v565
      %v567 = vrcp.pop %v454
      %v568 = vmul.f32 1.0, %v567
      %v569 = vrcp.pop %v455
      %v570 = vmul.f32 1.0, %v569
      %v571 = vrcp.pop %v456
      %v572 = vmul.f32 1.0, %v571
      %v573 = vrcp.pop %v457
      %v574 = vmul.f32 1.0, %v573
      %v575 = vrcp.pop %v458
      %v576 = vmul.f32 1.0, %v575
      %v577 = vrcp.pop %v459
      %v578 = vmul.f32 1.0, %v577
      %v579 = vrcp.pop %v460
      %v580 = vmul.f32 1.0, %v579
      %v581 = vrcp.pop %v461
      %v582 = vmul.f32 1.0, %v581
      %v583 = vrcp.pop %v462
      %v584 = vmul.f32 1.0, %v583
      %v585 = vrcp.pop %v463
      %v586 = vmul.f32 1.0, %v585
      %v587 = vrcp.pop %v464
      %v588 = vmul.f32 1.0, %v587
      %v589 = vrcp.pop %v465
      %v590 = vmul.f32 1.0, %v589
      %v591 = vrcp.pop %v466
      %v592 = vmul.f32 1.0, %v591
      %v593 = vrcp.pop %v467
      %v594 = vmul.f32 1.0, %v593
      %v595 = vrcp.pop %v468
      %v596 = vmul.f32 1.0, %v595
      %v597 = vmul.f32 %v470, %v149
      %v598 = vmul.f32 %v472, %v150
      %v599 = vmul.f32 %v474, %v151
      %v600 = vmul.f32 %v476, %v152
      %v601 = vmul.f32 %v478, %v153
      %v602 = vmul.f32 %v480, %v154
      %v603 = vmul.f32 %v482, %v155
      %v604 = vmul.f32 %v484, %v156
      %v605 = vmul.f32 %v486, %v157
      %v606 = vmul.f32 %v488, %v158
      %v607 = vmul.f32 %v490, %v159
      %v608 = vmul.f32 %v492, %v160
      %v609 = vmul.f32 %v494, %v161
      %v610 = vmul.f32 %v496, %v162
      %v611 = vmul.f32 %v498, %v163
      %v612 = vmul.f32 %v500, %v164
      %v613 = vmul.f32 %v502, %v165
      %v614 = vmul.f32 %v504, %v166
      %v615 = vmul.f32 %v506, %v167
      %v616 = vmul.f32 %v508, %v168
      %v617 = vmul.f32 %v510, %v169
      %v618 = vmul.f32 %v512, %v170
      %v619 = vmul.f32 %v514, %v171
      %v620 = vmul.f32 %v516, %v172
      %v621 = vmul.f32 %v518, %v173
      %v622 = vmul.f32 %v520, %v174
      %v623 = vmul.f32 %v522, %v175
      %v624 = vmul.f32 %v524, %v176
      %v625 = vmul.f32 %v526, %v177
      %v626 = vmul.f32 %v528, %v178
      %v627 = vmul.f32 %v530, %v179
      %v628 = vmul.f32 %v532, %v180
      %v629 = vmul.f32 %v534, %v181
      %v630 = vmul.f32 %v536, %v182
      %v631 = vmul.f32 %v538, %v183
      %v632 = vmul.f32 %v540, %v184
      %v633 = vmul.f32 %v542, %v185
      %v634 = vmul.f32 %v544, %v186
      %v635 = vmul.f32 %v546, %v187
      %v636 = vmul.f32 %v548, %v188
      %v637 = vmul.f32 %v550, %v189
      %v638 = vmul.f32 %v552, %v190
      %v639 = vmul.f32 %v554, %v191
      %v640 = vmul.f32 %v556, %v192
      %v641 = vmul.f32 %v558, %v193
      %v642 = vmul.f32 %v560, %v194
      %v643 = vmul.f32 %v562, %v195
      %v644 = vmul.f32 %v564, %v196
      %v645 = vmul.f32 %v566, %v197
      %v646 = vmul.f32 %v568, %v198
      %v647 = vmul.f32 %v570, %v199
      %v648 = vmul.f32 %v572, %v200
      %v649 = vmul.f32 %v574, %v201
      %v650 = vmul.f32 %v576, %v202
      %v651 = vmul.f32 %v578, %v203
      %v652 = vmul.f32 %v580, %v204
      %v653 = vmul.f32 %v582, %v205
      %v654 = vmul.f32 %v584, %v206
      %v655 = vmul.f32 %v586, %v207
      %v656 = vmul.f32 %v588, %v208
      %v657 = vmul.f32 %v590, %v209
      %v658 = vmul.f32 %v592, %v210
      %v659 = vmul.f32 %v594, %v211
      %v660 = vmul.f32 %v596, %v212
      %v661 = vadd.f32 %v597, %v598
      %v662 = vadd.f32 %v661, %v599
      %v663 = vadd.f32 %v662, %v600
      %v664 = vadd.f32 %v663, %v601
      %v665 = vadd.f32 %v664, %v602
      %v666 = vadd.f32 %v665, %v603
      %v667 = vadd.f32 %v666, %v604
      %v668 = vadd.f32 %v667, %v605
      %v669 = vadd.f32 %v668, %v606
      %v670 = vadd.f32 %v669, %v607
      %v671 = vadd.f32 %v670, %v608
      %v672 = vadd.f32 %v671, %v609
      %v673 = vadd.f32 %v672, %v610
      %v674 = vadd.f32 %v673, %v611
      %v675 = vadd.f32 %v674, %v612
      %v676 = vadd.f32 %v675, %v613
      %v677 = vadd.f32 %v676, %v614
      %v678 = vadd.f32 %v677, %v615
      %v679 = vadd.f32 %v678, %v616
      %v680 = vadd.f32 %v679, %v617
      %v681 = vadd.f32 %v680, %v618
      %v682 = vadd.f32 %v681, %v619
      %v683 = vadd.f32 %v682, %v620
      %v684 = vadd.f32 %v683, %v621
      %v685 = vadd.f32 %v684, %v622
      %v686 = vadd.f32 %v685, %v623
      %v687 = vadd.f32 %v686, %v624
      %v688 = vadd.f32 %v687, %v625
      %v689 = vadd.f32 %v688, %v626
      %v690 = vadd.f32 %v689, %v627
      %v691 = vadd.f32 %v690, %v628
      %v692 = vadd.f32 %v691, %v629
      %v693 = vadd.f32 %v692, %v630
      %v694 = vadd.f32 %v693, %v631
      %v695 = vadd.f32 %v694, %v632
      %v696 = vadd.f32 %v695, %v633
      %v697 = vadd.f32 %v696, %v634
      %v698 = vadd.f32 %v697, %v635
      %v699 = vadd.f32 %v698, %v636
      %v700 = vadd.f32 %v699, %v637
      %v701 = vadd.f32 %v700, %v638
      %v702 = vadd.f32 %v701, %v639
      %v703 = vadd.f32 %v702, %v640
      %v704 = vadd.f32 %v703, %v641
      %v705 = vadd.f32 %v704, %v642
      %v706 = vadd.f32 %v705, %v643
      %v707 = vadd.f32 %v706, %v644
      %v708 = vadd.f32 %v707, %v645
      %v709 = vadd.f32 %v708, %v646
      %v710 = vadd.f32 %v709, %v647
      %v711 = vadd.f32 %v710, %v648
      %v712 = vadd.f32 %v711, %v649
      %v713 = vadd.f32 %v712, %v650
      %v714 = vadd.f32 %v713, %v651
      %v715 = vadd.f32 %v714, %v652
      %v716 = vadd.f32 %v715, %v653
      %v717 = vadd.f32 %v716, %v654
      %v718 = vadd.f32 %v717, %v655
      %v719 = vadd.f32 %v718, %v656
      %v720 = vadd.f32 %v719, %v657
      %v721 = vadd.f32 %v720, %v658
      %v722 = vadd.f32 %v721, %v659
      %v723 = vadd.f32 %v722, %v660
      %v724 = vadd.f32 %v83, %v723
      %v725 = vadd.f32 %v470, %v149
      %v726 = vadd.f32 %v472, %v150
      %v727 = vadd.f32 %v474, %v151
      %v728 = vadd.f32 %v476, %v152
      %v729 = vadd.f32 %v478, %v153
      %v730 = vadd.f32 %v480, %v154
      %v731 = vadd.f32 %v482, %v155
      %v732 = vadd.f32 %v484, %v156
      %v733 = vadd.f32 %v486, %v157
      %v734 = vadd.f32 %v488, %v158
      %v735 = vadd.f32 %v490, %v159
      %v736 = vadd.f32 %v492, %v160
      %v737 = vadd.f32 %v494, %v161
      %v738 = vadd.f32 %v496, %v162
      %v739 = vadd.f32 %v498, %v163
      %v740 = vadd.f32 %v500, %v164
      %v741 = vadd.f32 %v502, %v165
      %v742 = vadd.f32 %v504, %v166
      %v743 = vadd.f32 %v506, %v167
      %v744 = vadd.f32 %v508, %v168
      %v745 = vadd.f32 %v510, %v169
      %v746 = vadd.f32 %v512, %v170
      %v747 = vadd.f32 %v514, %v171
      %v748 = vadd.f32 %v516, %v172
      %v749 = vadd.f32 %v518, %v173
      %v750 = vadd.f32 %v520, %v174
      %v751 = vadd.f32 %v522, %v175
      %v752 = vadd.f32 %v524, %v176
      %v753 = vadd.f32 %v526, %v177
      %v754 = vadd.f32 %v528, %v178
      %v755 = vadd.f32 %v530, %v179
      %v756 = vadd.f32 %v532, %v180
      %v757 = vadd.f32 %v534, %v181
      %v758 = vadd.f32 %v536, %v182
      %v759 = vadd.f32 %v538, %v183
      %v760 = vadd.f32 %v540, %v184
      %v761 = vadd.f32 %v542, %v185
      %v762 = vadd.f32 %v544, %v186
      %v763 = vadd.f32 %v546, %v187
      %v764 = vadd.f32 %v548, %v188
      %v765 = vadd.f32 %v550, %v189
      %v766 = vadd.f32 %v552, %v190
      %v767 = vadd.f32 %v554, %v191
      %v768 = vadd.f32 %v556, %v192
      %v769 = vadd.f32 %v558, %v193
      %v770 = vadd.f32 %v560, %v194
      %v771 = vadd.f32 %v562, %v195
      %v772 = vadd.f32 %v564, %v196
      %v773 = vadd.f32 %v566, %v197
      %v774 = vadd.f32 %v568, %v198
      %v775 = vadd.f32 %v570, %v199
      %v776 = vadd.f32 %v572, %v200
      %v777 = vadd.f32 %v574, %v201
      %v778 = vadd.f32 %v576, %v202
      %v779 = vadd.f32 %v578, %v203
      %v780 = vadd.f32 %v580, %v204
      %v781 = vadd.f32 %v582, %v205
      %v782 = vadd.f32 %v584, %v206
      %v783 = vadd.f32 %v586, %v207
      %v784 = vadd.f32 %v588, %v208
      %v785 = vadd.f32 %v590, %v209
      %v786 = vadd.f32 %v592, %v210
      %v787 = vadd.f32 %v594, %v211
      %v788 = vadd.f32 %v596, %v212
      %v789 = vadd.f32 %v725, %v726
      %v790 = vadd.f32 %v789, %v727
      %v791 = vadd.f32 %v790, %v728
      %v792 = vadd.f32 %v791, %v729
      %v793 = vadd.f32 %v792, %v730
      %v794 = vadd.f32 %v793, %v731
      %v795 = vadd.f32 %v794, %v732
      %v796 = vadd.f32 %v795, %v733
      %v797 = vadd.f32 %v796, %v734
      %v798 = vadd.f32 %v797, %v735
      %v799 = vadd.f32 %v798, %v736
      %v800 = vadd.f32 %v799, %v737
      %v801 = vadd.f32 %v800, %v738
      %v802 = vadd.f32 %v801, %v739
      %v803 = vadd.f32 %v802, %v740
      %v804 = vadd.f32 %v803, %v741
      %v805 = vadd.f32 %v804, %v742
      %v806 = vadd.f32 %v805, %v743
      %v807 = vadd.f32 %v806, %v744
      %v808 = vadd.f32 %v807, %v745
      %v809 = vadd.f32 %v808, %v746
      %v810 = vadd.f32 %v809, %v747
      %v811 = vadd.f32 %v810, %v748
      %v812 = vadd.f32 %v811, %v749
      %v813 = vadd.f32 %v812, %v750
      %v814 = vadd.f32 %v813, %v751
      %v815 = vadd.f32 %v814, %v752
      %v816 = vadd.f32 %v815, %v753
      %v817 = vadd.f32 %v816, %v754
      %v818 = vadd.f32 %v817, %v755
      %v819 = vadd.f32 %v818, %v756
      %v820 = vadd.f32 %v819, %v757
      %v821 = vadd.f32 %v820, %v758
      %v822 = vadd.f32 %v821, %v759
      %v823 = vadd.f32 %v822, %v760
      %v824 = vadd.f32 %v823, %v761
      %v825 = vadd.f32 %v824, %v762
      %v826 = vadd.f32 %v825, %v763
      %v827 = vadd.f32 %v826, %v764
      %v828 = vadd.f32 %v827, %v765
      %v829 = vadd.f32 %v828, %v766
      %v830 = vadd.f32 %v829, %v767
      %v831 = vadd.f32 %v830, %v768
      %v832 = vadd.f32 %v831, %v769
      %v833 = vadd.f32 %v832, %v770
      %v834 = vadd.f32 %v833, %v771
      %v835 = vadd.f32 %v834, %v772
      %v836 = vadd.f32 %v835, %v773
      %v837 = vadd.f32 %v836, %v774
      %v838 = vadd.f32 %v837, %v775
      %v839 = vadd.f32 %v838, %v776
      %v840 = vadd.f32 %v839, %v777
      %v841 = vadd.f32 %v840, %v778
      %v842 = vadd.f32 %v841, %v779
      %v843 = vadd.f32 %v842, %v780
      %v844 = vadd.f32 %v843, %v781
      %v845 = vadd.f32 %v844, %v782
      %v846 = vadd.f32 %v845, %v783
      %v847 = vadd.f32 %v846, %v784
      %v848 = vadd.f32 %v847, %v785
      %v849 = vadd.f32 %v848, %v786
      %v850 = vadd.f32 %v849, %v787
      %v851 = vadd.f32 %v850, %v788
      %v852 = vadd.f32 %v84, %v851
      %853 = vst [vmem:[#allocation2] sm:$0xff] %v724
      %854 = vst [vmem:[#allocation3] sm:$0xff] %v852
    $region25: #{tpu_custom_call.1} parent=1 // pred_fallthru
      _
    %p855 = scmp.ge.s32.totalorder %s78, 0
    // Predicated region
    $region26: #{tpu_custom_call.1} parent=1 // pred_check
      %p856 = pneg %p855
    $region27: #{tpu_custom_call.1} parent=1 // pred_check_branch
      %858 = sbr.rel (%p856) target = $region29
    $region28: #{tpu_custom_call.1} parent=1 // pred_region
      %v859 = vld [vmem:[#allocation2] sm:$0xff]
      %v860 = vld [vmem:[#allocation3] sm:$0xff]
      %v861 = vld [vmem:[#allocation4] sm:$0xff]
      %v862 = vld [vmem:[#allocation4 + $0x8] sm:$0xff]
      %v863 = vld [vmem:[#allocation4 + $0x10] sm:$0xff]
      %v864 = vld [vmem:[#allocation4 + $0x18] sm:$0xff]
      %v865 = vld [vmem:[#allocation4 + $0x20] sm:$0xff]
      %v866 = vld [vmem:[#allocation4 + $0x28] sm:$0xff]
      %v867 = vld [vmem:[#allocation4 + $0x30] sm:$0xff]
      %v868 = vld [vmem:[#allocation4 + $0x38] sm:$0xff]
      %v869 = vld [vmem:[#allocation4 + $0x40] sm:$0xff]
      %v870 = vld [vmem:[#allocation4 + $0x48] sm:$0xff]
      %v871 = vld [vmem:[#allocation4 + $0x50] sm:$0xff]
      %v872 = vld [vmem:[#allocation4 + $0x58] sm:$0xff]
      %v873 = vld [vmem:[#allocation4 + $0x60] sm:$0xff]
      %v874 = vld [vmem:[#allocation4 + $0x68] sm:$0xff]
      %v875 = vld [vmem:[#allocation4 + $0x70] sm:$0xff]
      %v876 = vld [vmem:[#allocation4 + $0x78] sm:$0xff]
      %v877 = vld [vmem:[#allocation4 + $0x80] sm:$0xff]
      %v878 = vld [vmem:[#allocation4 + $0x88] sm:$0xff]
      %v879 = vld [vmem:[#allocation4 + $0x90] sm:$0xff]
      %v880 = vld [vmem:[#allocation4 + $0x98] sm:$0xff]
      %v881 = vld [vmem:[#allocation4 + $0xa0] sm:$0xff]
      %v882 = vld [vmem:[#allocation4 + $0xa8] sm:$0xff]
      %v883 = vld [vmem:[#allocation4 + $0xb0] sm:$0xff]
      %v884 = vld [vmem:[#allocation4 + $0xb8] sm:$0xff]
      %v885 = vld [vmem:[#allocation4 + $0xc0] sm:$0xff]
      %v886 = vld [vmem:[#allocation4 + $0xc8] sm:$0xff]
      %v887 = vld [vmem:[#allocation4 + $0xd0] sm:$0xff]
      %v888 = vld [vmem:[#allocation4 + $0xd8] sm:$0xff]
      %v889 = vld [vmem:[#allocation4 + $0xe0] sm:$0xff]
      %v890 = vld [vmem:[#allocation4 + $0xe8] sm:$0xff]
      %v891 = vld [vmem:[#allocation4 + $0xf0] sm:$0xff]
      %v892 = vld [vmem:[#allocation4 + $0xf8] sm:$0xff]
      %v893 = vld [vmem:[#allocation4 + $0x100] sm:$0xff]
      %v894 = vld [vmem:[#allocation4 + $0x108] sm:$0xff]
      %v895 = vld [vmem:[#allocation4 + $0x110] sm:$0xff]
      %v896 = vld [vmem:[#allocation4 + $0x118] sm:$0xff]
      %v897 = vld [vmem:[#allocation4 + $0x120] sm:$0xff]
      %v898 = vld [vmem:[#allocation4 + $0x128] sm:$0xff]
      %v899 = vld [vmem:[#allocation4 + $0x130] sm:$0xff]
      %v900 = vld [vmem:[#allocation4 + $0x138] sm:$0xff]
      %v901 = vld [vmem:[#allocation4 + $0x140] sm:$0xff]
      %v902 = vld [vmem:[#allocation4 + $0x148] sm:$0xff]
      %v903 = vld [vmem:[#allocation4 + $0x150] sm:$0xff]
      %v904 = vld [vmem:[#allocation4 + $0x158] sm:$0xff]
      %v905 = vld [vmem:[#allocation4 + $0x160] sm:$0xff]
      %v906 = vld [vmem:[#allocation4 + $0x168] sm:$0xff]
      %v907 = vld [vmem:[#allocation4 + $0x170] sm:$0xff]
      %v908 = vld [vmem:[#allocation4 + $0x178] sm:$0xff]
      %v909 = vld [vmem:[#allocation4 + $0x180] sm:$0xff]
      %v910 = vld [vmem:[#allocation4 + $0x188] sm:$0xff]
      %v911 = vld [vmem:[#allocation4 + $0x190] sm:$0xff]
      %v912 = vld [vmem:[#allocation4 + $0x198] sm:$0xff]
      %v913 = vld [vmem:[#allocation4 + $0x1a0] sm:$0xff]
      %v914 = vld [vmem:[#allocation4 + $0x1a8] sm:$0xff]
      %v915 = vld [vmem:[#allocation4 + $0x1b0] sm:$0xff]
      %v916 = vld [vmem:[#allocation4 + $0x1b8] sm:$0xff]
      %v917 = vld [vmem:[#allocation4 + $0x1c0] sm:$0xff]
      %v918 = vld [vmem:[#allocation4 + $0x1c8] sm:$0xff]
      %v919 = vld [vmem:[#allocation4 + $0x1d0] sm:$0xff]
      %v920 = vld [vmem:[#allocation4 + $0x1d8] sm:$0xff]
      %v921 = vld [vmem:[#allocation4 + $0x1e0] sm:$0xff]
      %v922 = vld [vmem:[#allocation4 + $0x1e8] sm:$0xff]
      %v923 = vld [vmem:[#allocation4 + $0x1f0] sm:$0xff]
      %v924 = vld [vmem:[#allocation4 + $0x1f8] sm:$0xff]
      %v925 = vld [vmem:[#allocation7] sm:$0xff]
      %v926 = vld [vmem:[#allocation7 + $0x8] sm:$0xff]
      %v927 = vld [vmem:[#allocation7 + $0x10] sm:$0xff]
      %v928 = vld [vmem:[#allocation7 + $0x18] sm:$0xff]
      %v929 = vld [vmem:[#allocation7 + $0x20] sm:$0xff]
      %v930 = vld [vmem:[#allocation7 + $0x28] sm:$0xff]
      %v931 = vld [vmem:[#allocation7 + $0x30] sm:$0xff]
      %v932 = vld [vmem:[#allocation7 + $0x38] sm:$0xff]
      %v933 = vld [vmem:[#allocation7 + $0x40] sm:$0xff]
      %v934 = vld [vmem:[#allocation7 + $0x48] sm:$0xff]
      %v935 = vld [vmem:[#allocation7 + $0x50] sm:$0xff]
      %v936 = vld [vmem:[#allocation7 + $0x58] sm:$0xff]
      %v937 = vld [vmem:[#allocation7 + $0x60] sm:$0xff]
      %v938 = vld [vmem:[#allocation7 + $0x68] sm:$0xff]
      %v939 = vld [vmem:[#allocation7 + $0x70] sm:$0xff]
      %v940 = vld [vmem:[#allocation7 + $0x78] sm:$0xff]
      %v941 = vld [vmem:[#allocation7 + $0x80] sm:$0xff]
      %v942 = vld [vmem:[#allocation7 + $0x88] sm:$0xff]
      %v943 = vld [vmem:[#allocation7 + $0x90] sm:$0xff]
      %v944 = vld [vmem:[#allocation7 + $0x98] sm:$0xff]
      %v945 = vld [vmem:[#allocation7 + $0xa0] sm:$0xff]
      %v946 = vld [vmem:[#allocation7 + $0xa8] sm:$0xff]
      %v947 = vld [vmem:[#allocation7 + $0xb0] sm:$0xff]
      %v948 = vld [vmem:[#allocation7 + $0xb8] sm:$0xff]
      %v949 = vld [vmem:[#allocation7 + $0xc0] sm:$0xff]
      %v950 = vld [vmem:[#allocation7 + $0xc8] sm:$0xff]
      %v951 = vld [vmem:[#allocation7 + $0xd0] sm:$0xff]
      %v952 = vld [vmem:[#allocation7 + $0xd8] sm:$0xff]
      %v953 = vld [vmem:[#allocation7 + $0xe0] sm:$0xff]
      %v954 = vld [vmem:[#allocation7 + $0xe8] sm:$0xff]
      %v955 = vld [vmem:[#allocation7 + $0xf0] sm:$0xff]
      %v956 = vld [vmem:[#allocation7 + $0xf8] sm:$0xff]
      %v957 = vld [vmem:[#allocation7 + $0x100] sm:$0xff]
      %v958 = vld [vmem:[#allocation7 + $0x108] sm:$0xff]
      %v959 = vld [vmem:[#allocation7 + $0x110] sm:$0xff]
      %v960 = vld [vmem:[#allocation7 + $0x118] sm:$0xff]
      %v961 = vld [vmem:[#allocation7 + $0x120] sm:$0xff]
      %v962 = vld [vmem:[#allocation7 + $0x128] sm:$0xff]
      %v963 = vld [vmem:[#allocation7 + $0x130] sm:$0xff]
      %v964 = vld [vmem:[#allocation7 + $0x138] sm:$0xff]
      %v965 = vld [vmem:[#allocation7 + $0x140] sm:$0xff]
      %v966 = vld [vmem:[#allocation7 + $0x148] sm:$0xff]
      %v967 = vld [vmem:[#allocation7 + $0x150] sm:$0xff]
      %v968 = vld [vmem:[#allocation7 + $0x158] sm:$0xff]
      %v969 = vld [vmem:[#allocation7 + $0x160] sm:$0xff]
      %v970 = vld [vmem:[#allocation7 + $0x168] sm:$0xff]
      %v971 = vld [vmem:[#allocation7 + $0x170] sm:$0xff]
      %v972 = vld [vmem:[#allocation7 + $0x178] sm:$0xff]
      %v973 = vld [vmem:[#allocation7 + $0x180] sm:$0xff]
      %v974 = vld [vmem:[#allocation7 + $0x188] sm:$0xff]
      %v975 = vld [vmem:[#allocation7 + $0x190] sm:$0xff]
      %v976 = vld [vmem:[#allocation7 + $0x198] sm:$0xff]
      %v977 = vld [vmem:[#allocation7 + $0x1a0] sm:$0xff]
      %v978 = vld [vmem:[#allocation7 + $0x1a8] sm:$0xff]
      %v979 = vld [vmem:[#allocation7 + $0x1b0] sm:$0xff]
      %v980 = vld [vmem:[#allocation7 + $0x1b8] sm:$0xff]
      %v981 = vld [vmem:[#allocation7 + $0x1c0] sm:$0xff]
      %v982 = vld [vmem:[#allocation7 + $0x1c8] sm:$0xff]
      %v983 = vld [vmem:[#allocation7 + $0x1d0] sm:$0xff]
      %v984 = vld [vmem:[#allocation7 + $0x1d8] sm:$0xff]
      %v985 = vld [vmem:[#allocation7 + $0x1e0] sm:$0xff]
      %v986 = vld [vmem:[#allocation7 + $0x1e8] sm:$0xff]
      %v987 = vld [vmem:[#allocation7 + $0x1f0] sm:$0xff]
      %v988 = vld [vmem:[#allocation7 + $0x1f8] sm:$0xff]
      %v989 = vxor.u32 %v861, 2147483648
      %v990 = vxor.u32 %v862, 2147483648
      %v991 = vxor.u32 %v863, 2147483648
      %v992 = vxor.u32 %v864, 2147483648
      %v993 = vxor.u32 %v865, 2147483648
      %v994 = vxor.u32 %v866, 2147483648
      %v995 = vxor.u32 %v867, 2147483648
      %v996 = vxor.u32 %v868, 2147483648
      %v997 = vxor.u32 %v869, 2147483648
      %v998 = vxor.u32 %v870, 2147483648
      %v999 = vxor.u32 %v871, 2147483648
      %v1000 = vxor.u32 %v872, 2147483648
      %v1001 = vxor.u32 %v873, 2147483648
      %v1002 = vxor.u32 %v874, 2147483648
      %v1003 = vxor.u32 %v875, 2147483648
      %v1004 = vxor.u32 %v876, 2147483648
      %v1005 = vxor.u32 %v877, 2147483648
      %v1006 = vxor.u32 %v878, 2147483648
      %v1007 = vxor.u32 %v879, 2147483648
      %v1008 = vxor.u32 %v880, 2147483648
      %v1009 = vxor.u32 %v881, 2147483648
      %v1010 = vxor.u32 %v882, 2147483648
      %v1011 = vxor.u32 %v883, 2147483648
      %v1012 = vxor.u32 %v884, 2147483648
      %v1013 = vxor.u32 %v885, 2147483648
      %v1014 = vxor.u32 %v886, 2147483648
      %v1015 = vxor.u32 %v887, 2147483648
      %v1016 = vxor.u32 %v888, 2147483648
      %v1017 = vxor.u32 %v889, 2147483648
      %v1018 = vxor.u32 %v890, 2147483648
      %v1019 = vxor.u32 %v891, 2147483648
      %v1020 = vxor.u32 %v892, 2147483648
      %v1021 = vxor.u32 %v893, 2147483648
      %v1022 = vxor.u32 %v894, 2147483648
      %v1023 = vxor.u32 %v895, 2147483648
      %v1024 = vxor.u32 %v896, 2147483648
      %v1025 = vxor.u32 %v897, 2147483648
      %v1026 = vxor.u32 %v898, 2147483648
      %v1027 = vxor.u32 %v899, 2147483648
      %v1028 = vxor.u32 %v900, 2147483648
      %v1029 = vxor.u32 %v901, 2147483648
      %v1030 = vxor.u32 %v902, 2147483648
      %v1031 = vxor.u32 %v903, 2147483648
      %v1032 = vxor.u32 %v904, 2147483648
      %v1033 = vxor.u32 %v905, 2147483648
      %v1034 = vxor.u32 %v906, 2147483648
      %v1035 = vxor.u32 %v907, 2147483648
      %v1036 = vxor.u32 %v908, 2147483648
      %v1037 = vxor.u32 %v909, 2147483648
      %v1038 = vxor.u32 %v910, 2147483648
      %v1039 = vxor.u32 %v911, 2147483648
      %v1040 = vxor.u32 %v912, 2147483648
      %v1041 = vxor.u32 %v913, 2147483648
      %v1042 = vxor.u32 %v914, 2147483648
      %v1043 = vxor.u32 %v915, 2147483648
      %v1044 = vxor.u32 %v916, 2147483648
      %v1045 = vxor.u32 %v917, 2147483648
      %v1046 = vxor.u32 %v918, 2147483648
      %v1047 = vxor.u32 %v919, 2147483648
      %v1048 = vxor.u32 %v920, 2147483648
      %v1049 = vxor.u32 %v921, 2147483648
      %v1050 = vxor.u32 %v922, 2147483648
      %v1051 = vxor.u32 %v923, 2147483648
      %v1052 = vxor.u32 %v924, 2147483648
      %v1053 = vmul.f32 %v989, 1.442695
      %v1054 = vpow.pop %v1053
      %v1055 = vmul.f32 %v990, 1.442695
      %v1056 = vpow.pop %v1055
      %v1057 = vmul.f32 %v991, 1.442695
      %v1058 = vpow.pop %v1057
      %v1059 = vmul.f32 %v992, 1.442695
      %v1060 = vpow.pop %v1059
      %v1061 = vmul.f32 %v993, 1.442695
      %v1062 = vpow.pop %v1061
      %v1063 = vmul.f32 %v994, 1.442695
      %v1064 = vpow.pop %v1063
      %v1065 = vmul.f32 %v995, 1.442695
      %v1066 = vpow.pop %v1065
      %v1067 = vmul.f32 %v996, 1.442695
      %v1068 = vpow.pop %v1067
      %v1069 = vmul.f32 %v997, 1.442695
      %v1070 = vpow.pop %v1069
      %v1071 = vmul.f32 %v998, 1.442695
      %v1072 = vpow.pop %v1071
      %v1073 = vmul.f32 %v999, 1.442695
      %v1074 = vpow.pop %v1073
      %v1075 = vmul.f32 %v1000, 1.442695
      %v1076 = vpow.pop %v1075
      %v1077 = vmul.f32 %v1001, 1.442695
      %v1078 = vpow.pop %v1077
      %v1079 = vmul.f32 %v1002, 1.442695
      %v1080 = vpow.pop %v1079
      %v1081 = vmul.f32 %v1003, 1.442695
      %v1082 = vpow.pop %v1081
      %v1083 = vmul.f32 %v1004, 1.442695
      %v1084 = vpow.pop %v1083
      %v1085 = vmul.f32 %v1005, 1.442695
      %v1086 = vpow.pop %v1085
      %v1087 = vmul.f32 %v1006, 1.442695
      %v1088 = vpow.pop %v1087
      %v1089 = vmul.f32 %v1007, 1.442695
      %v1090 = vpow.pop %v1089
      %v1091 = vmul.f32 %v1008, 1.442695
      %v1092 = vpow.pop %v1091
      %v1093 = vmul.f32 %v1009, 1.442695
      %v1094 = vpow.pop %v1093
      %v1095 = vmul.f32 %v1010, 1.442695
      %v1096 = vpow.pop %v1095
      %v1097 = vmul.f32 %v1011, 1.442695
      %v1098 = vpow.pop %v1097
      %v1099 = vmul.f32 %v1012, 1.442695
      %v1100 = vpow.pop %v1099
      %v1101 = vmul.f32 %v1013, 1.442695
      %v1102 = vpow.pop %v1101
      %v1103 = vmul.f32 %v1014, 1.442695
      %v1104 = vpow.pop %v1103
      %v1105 = vmul.f32 %v1015, 1.442695
      %v1106 = vpow.pop %v1105
      %v1107 = vmul.f32 %v1016, 1.442695
      %v1108 = vpow.pop %v1107
      %v1109 = vmul.f32 %v1017, 1.442695
      %v1110 = vpow.pop %v1109
      %v1111 = vmul.f32 %v1018, 1.442695
      %v1112 = vpow.pop %v1111
      %v1113 = vmul.f32 %v1019, 1.442695
      %v1114 = vpow.pop %v1113
      %v1115 = vmul.f32 %v1020, 1.442695
      %v1116 = vpow.pop %v1115
      %v1117 = vmul.f32 %v1021, 1.442695
      %v1118 = vpow.pop %v1117
      %v1119 = vmul.f32 %v1022, 1.442695
      %v1120 = vpow.pop %v1119
      %v1121 = vmul.f32 %v1023, 1.442695
      %v1122 = vpow.pop %v1121
      %v1123 = vmul.f32 %v1024, 1.442695
      %v1124 = vpow.pop %v1123
      %v1125 = vmul.f32 %v1025, 1.442695
      %v1126 = vpow.pop %v1125
      %v1127 = vmul.f32 %v1026, 1.442695
      %v1128 = vpow.pop %v1127
      %v1129 = vmul.f32 %v1027, 1.442695
      %v1130 = vpow.pop %v1129
      %v1131 = vmul.f32 %v1028, 1.442695
      %v1132 = vpow.pop %v1131
      %v1133 = vmul.f32 %v1029, 1.442695
      %v1134 = vpow.pop %v1133
      %v1135 = vmul.f32 %v1030, 1.442695
      %v1136 = vpow.pop %v1135
      %v1137 = vmul.f32 %v1031, 1.442695
      %v1138 = vpow.pop %v1137
      %v1139 = vmul.f32 %v1032, 1.442695
      %v1140 = vpow.pop %v1139
      %v1141 = vmul.f32 %v1033, 1.442695
      %v1142 = vpow.pop %v1141
      %v1143 = vmul.f32 %v1034, 1.442695
      %v1144 = vpow.pop %v1143
      %v1145 = vmul.f32 %v1035, 1.442695
      %v1146 = vpow.pop %v1145
      %v1147 = vmul.f32 %v1036, 1.442695
      %v1148 = vpow.pop %v1147
      %v1149 = vmul.f32 %v1037, 1.442695
      %v1150 = vpow.pop %v1149
      %v1151 = vmul.f32 %v1038, 1.442695
      %v1152 = vpow.pop %v1151
      %v1153 = vmul.f32 %v1039, 1.442695
      %v1154 = vpow.pop %v1153
      %v1155 = vmul.f32 %v1040, 1.442695
      %v1156 = vpow.pop %v1155
      %v1157 = vmul.f32 %v1041, 1.442695
      %v1158 = vpow.pop %v1157
      %v1159 = vmul.f32 %v1042, 1.442695
      %v1160 = vpow.pop %v1159
      %v1161 = vmul.f32 %v1043, 1.442695
      %v1162 = vpow.pop %v1161
      %v1163 = vmul.f32 %v1044, 1.442695
      %v1164 = vpow.pop %v1163
      %v1165 = vmul.f32 %v1045, 1.442695
      %v1166 = vpow.pop %v1165
      %v1167 = vmul.f32 %v1046, 1.442695
      %v1168 = vpow.pop %v1167
      %v1169 = vmul.f32 %v1047, 1.442695
      %v1170 = vpow.pop %v1169
      %v1171 = vmul.f32 %v1048, 1.442695
      %v1172 = vpow.pop %v1171
      %v1173 = vmul.f32 %v1049, 1.442695
      %v1174 = vpow.pop %v1173
      %v1175 = vmul.f32 %v1050, 1.442695
      %v1176 = vpow.pop %v1175
      %v1177 = vmul.f32 %v1051, 1.442695
      %v1178 = vpow.pop %v1177
      %v1179 = vmul.f32 %v1052, 1.442695
      %v1180 = vpow.pop %v1179
      %v1181 = vadd.f32 %v1054, 1.0
      %v1182 = vadd.f32 %v1056, 1.0
      %v1183 = vadd.f32 %v1058, 1.0
      %v1184 = vadd.f32 %v1060, 1.0
      %v1185 = vadd.f32 %v1062, 1.0
      %v1186 = vadd.f32 %v1064, 1.0
      %v1187 = vadd.f32 %v1066, 1.0
      %v1188 = vadd.f32 %v1068, 1.0
      %v1189 = vadd.f32 %v1070, 1.0
      %v1190 = vadd.f32 %v1072, 1.0
      %v1191 = vadd.f32 %v1074, 1.0
      %v1192 = vadd.f32 %v1076, 1.0
      %v1193 = vadd.f32 %v1078, 1.0
      %v1194 = vadd.f32 %v1080, 1.0
      %v1195 = vadd.f32 %v1082, 1.0
      %v1196 = vadd.f32 %v1084, 1.0
      %v1197 = vadd.f32 %v1086, 1.0
      %v1198 = vadd.f32 %v1088, 1.0
      %v1199 = vadd.f32 %v1090, 1.0
      %v1200 = vadd.f32 %v1092, 1.0
      %v1201 = vadd.f32 %v1094, 1.0
      %v1202 = vadd.f32 %v1096, 1.0
      %v1203 = vadd.f32 %v1098, 1.0
      %v1204 = vadd.f32 %v1100, 1.0
      %v1205 = vadd.f32 %v1102, 1.0
      %v1206 = vadd.f32 %v1104, 1.0
      %v1207 = vadd.f32 %v1106, 1.0
      %v1208 = vadd.f32 %v1108, 1.0
      %v1209 = vadd.f32 %v1110, 1.0
      %v1210 = vadd.f32 %v1112, 1.0
      %v1211 = vadd.f32 %v1114, 1.0
      %v1212 = vadd.f32 %v1116, 1.0
      %v1213 = vadd.f32 %v1118, 1.0
      %v1214 = vadd.f32 %v1120, 1.0
      %v1215 = vadd.f32 %v1122, 1.0
      %v1216 = vadd.f32 %v1124, 1.0
      %v1217 = vadd.f32 %v1126, 1.0
      %v1218 = vadd.f32 %v1128, 1.0
      %v1219 = vadd.f32 %v1130, 1.0
      %v1220 = vadd.f32 %v1132, 1.0
      %v1221 = vadd.f32 %v1134, 1.0
      %v1222 = vadd.f32 %v1136, 1.0
      %v1223 = vadd.f32 %v1138, 1.0
      %v1224 = vadd.f32 %v1140, 1.0
      %v1225 = vadd.f32 %v1142, 1.0
      %v1226 = vadd.f32 %v1144, 1.0
      %v1227 = vadd.f32 %v1146, 1.0
      %v1228 = vadd.f32 %v1148, 1.0
      %v1229 = vadd.f32 %v1150, 1.0
      %v1230 = vadd.f32 %v1152, 1.0
      %v1231 = vadd.f32 %v1154, 1.0
      %v1232 = vadd.f32 %v1156, 1.0
      %v1233 = vadd.f32 %v1158, 1.0
      %v1234 = vadd.f32 %v1160, 1.0
      %v1235 = vadd.f32 %v1162, 1.0
      %v1236 = vadd.f32 %v1164, 1.0
      %v1237 = vadd.f32 %v1166, 1.0
      %v1238 = vadd.f32 %v1168, 1.0
      %v1239 = vadd.f32 %v1170, 1.0
      %v1240 = vadd.f32 %v1172, 1.0
      %v1241 = vadd.f32 %v1174, 1.0
      %v1242 = vadd.f32 %v1176, 1.0
      %v1243 = vadd.f32 %v1178, 1.0
      %v1244 = vadd.f32 %v1180, 1.0
      %v1245 = vrcp.pop %v1181
      %v1246 = vmul.f32 1.0, %v1245
      %v1247 = vrcp.pop %v1182
      %v1248 = vmul.f32 1.0, %v1247
      %v1249 = vrcp.pop %v1183
      %v1250 = vmul.f32 1.0, %v1249
      %v1251 = vrcp.pop %v1184
      %v1252 = vmul.f32 1.0, %v1251
      %v1253 = vrcp.pop %v1185
      %v1254 = vmul.f32 1.0, %v1253
      %v1255 = vrcp.pop %v1186
      %v1256 = vmul.f32 1.0, %v1255
      %v1257 = vrcp.pop %v1187
      %v1258 = vmul.f32 1.0, %v1257
      %v1259 = vrcp.pop %v1188
      %v1260 = vmul.f32 1.0, %v1259
      %v1261 = vrcp.pop %v1189
      %v1262 = vmul.f32 1.0, %v1261
      %v1263 = vrcp.pop %v1190
      %v1264 = vmul.f32 1.0, %v1263
      %v1265 = vrcp.pop %v1191
      %v1266 = vmul.f32 1.0, %v1265
      %v1267 = vrcp.pop %v1192
      %v1268 = vmul.f32 1.0, %v1267
      %v1269 = vrcp.pop %v1193
      %v1270 = vmul.f32 1.0, %v1269
      %v1271 = vrcp.pop %v1194
      %v1272 = vmul.f32 1.0, %v1271
      %v1273 = vrcp.pop %v1195
      %v1274 = vmul.f32 1.0, %v1273
      %v1275 = vrcp.pop %v1196
      %v1276 = vmul.f32 1.0, %v1275
      %v1277 = vrcp.pop %v1197
      %v1278 = vmul.f32 1.0, %v1277
      %v1279 = vrcp.pop %v1198
      %v1280 = vmul.f32 1.0, %v1279
      %v1281 = vrcp.pop %v1199
      %v1282 = vmul.f32 1.0, %v1281
      %v1283 = vrcp.pop %v1200
      %v1284 = vmul.f32 1.0, %v1283
      %v1285 = vrcp.pop %v1201
      %v1286 = vmul.f32 1.0, %v1285
      %v1287 = vrcp.pop %v1202
      %v1288 = vmul.f32 1.0, %v1287
      %v1289 = vrcp.pop %v1203
      %v1290 = vmul.f32 1.0, %v1289
      %v1291 = vrcp.pop %v1204
      %v1292 = vmul.f32 1.0, %v1291
      %v1293 = vrcp.pop %v1205
      %v1294 = vmul.f32 1.0, %v1293
      %v1295 = vrcp.pop %v1206
      %v1296 = vmul.f32 1.0, %v1295
      %v1297 = vrcp.pop %v1207
      %v1298 = vmul.f32 1.0, %v1297
      %v1299 = vrcp.pop %v1208
      %v1300 = vmul.f32 1.0, %v1299
      %v1301 = vrcp.pop %v1209
      %v1302 = vmul.f32 1.0, %v1301
      %v1303 = vrcp.pop %v1210
      %v1304 = vmul.f32 1.0, %v1303
      %v1305 = vrcp.pop %v1211
      %v1306 = vmul.f32 1.0, %v1305
      %v1307 = vrcp.pop %v1212
      %v1308 = vmul.f32 1.0, %v1307
      %v1309 = vrcp.pop %v1213
      %v1310 = vmul.f32 1.0, %v1309
      %v1311 = vrcp.pop %v1214
      %v1312 = vmul.f32 1.0, %v1311
      %v1313 = vrcp.pop %v1215
      %v1314 = vmul.f32 1.0, %v1313
      %v1315 = vrcp.pop %v1216
      %v1316 = vmul.f32 1.0, %v1315
      %v1317 = vrcp.pop %v1217
      %v1318 = vmul.f32 1.0, %v1317
      %v1319 = vrcp.pop %v1218
      %v1320 = vmul.f32 1.0, %v1319
      %v1321 = vrcp.pop %v1219
      %v1322 = vmul.f32 1.0, %v1321
      %v1323 = vrcp.pop %v1220
      %v1324 = vmul.f32 1.0, %v1323
      %v1325 = vrcp.pop %v1221
      %v1326 = vmul.f32 1.0, %v1325
      %v1327 = vrcp.pop %v1222
      %v1328 = vmul.f32 1.0, %v1327
      %v1329 = vrcp.pop %v1223
      %v1330 = vmul.f32 1.0, %v1329
      %v1331 = vrcp.pop %v1224
      %v1332 = vmul.f32 1.0, %v1331
      %v1333 = vrcp.pop %v1225
      %v1334 = vmul.f32 1.0, %v1333
      %v1335 = vrcp.pop %v1226
      %v1336 = vmul.f32 1.0, %v1335
      %v1337 = vrcp.pop %v1227
      %v1338 = vmul.f32 1.0, %v1337
      %v1339 = vrcp.pop %v1228
      %v1340 = vmul.f32 1.0, %v1339
      %v1341 = vrcp.pop %v1229
      %v1342 = vmul.f32 1.0, %v1341
      %v1343 = vrcp.pop %v1230
      %v1344 = vmul.f32 1.0, %v1343
      %v1345 = vrcp.pop %v1231
      %v1346 = vmul.f32 1.0, %v1345
      %v1347 = vrcp.pop %v1232
      %v1348 = vmul.f32 1.0, %v1347
      %v1349 = vrcp.pop %v1233
      %v1350 = vmul.f32 1.0, %v1349
      %v1351 = vrcp.pop %v1234
      %v1352 = vmul.f32 1.0, %v1351
      %v1353 = vrcp.pop %v1235
      %v1354 = vmul.f32 1.0, %v1353
      %v1355 = vrcp.pop %v1236
      %v1356 = vmul.f32 1.0, %v1355
      %v1357 = vrcp.pop %v1237
      %v1358 = vmul.f32 1.0, %v1357
      %v1359 = vrcp.pop %v1238
      %v1360 = vmul.f32 1.0, %v1359
      %v1361 = vrcp.pop %v1239
      %v1362 = vmul.f32 1.0, %v1361
      %v1363 = vrcp.pop %v1240
      %v1364 = vmul.f32 1.0, %v1363
      %v1365 = vrcp.pop %v1241
      %v1366 = vmul.f32 1.0, %v1365
      %v1367 = vrcp.pop %v1242
      %v1368 = vmul.f32 1.0, %v1367
      %v1369 = vrcp.pop %v1243
      %v1370 = vmul.f32 1.0, %v1369
      %v1371 = vrcp.pop %v1244
      %v1372 = vmul.f32 1.0, %v1371
      %s1373 = smul.u32 %s78, 512
      %s1374 = sadd.s32 %s1373, 0
      %v1375 = vlaneseq
      %v1376 = vshrl.u32 %v1375, 7
      %v1377 = vadd.s32 %v1376, 8
      %v1378 = vadd.s32 %v1376, 16
      %v1379 = vadd.s32 %v1376, 24
      %v1380 = vadd.s32 %v1376, 32
      %v1381 = vadd.s32 %v1376, 40
      %v1382 = vadd.s32 %v1376, 48
      %v1383 = vadd.s32 %v1376, 56
      %v1384 = vadd.s32 %v1376, 64
      %v1385 = vadd.s32 %v1376, 72
      %v1386 = vadd.s32 %v1376, 80
      %v1387 = vadd.s32 %v1376, 88
      %v1388 = vadd.s32 %v1376, 96
      %v1389 = vadd.s32 %v1376, 104
      %v1390 = vadd.s32 %v1376, 112
      %v1391 = vadd.s32 %v1376, 120
      %v1392 = vadd.s32 %v1376, 128
      %v1393 = vadd.s32 %v1376, 136
      %v1394 = vadd.s32 %v1376, 144
      %v1395 = vadd.s32 %v1376, 152
      %v1396 = vadd.s32 %v1376, 160
      %v1397 = vadd.s32 %v1376, 168
      %v1398 = vadd.s32 %v1376, 176
      %v1399 = vadd.s32 %v1376, 184
      %v1400 = vadd.s32 %v1376, 192
      %v1401 = vadd.s32 %v1376, 200
      %v1402 = vadd.s32 %v1376, 208
      %v1403 = vadd.s32 %v1376, 216
      %v1404 = vadd.s32 %v1376, 224
      %v1405 = vadd.s32 %v1376, 232
      %v1406 = vadd.s32 %v1376, 240
      %v1407 = vadd.s32 %v1376, 248
      %v1408 = vadd.s32 %v1376, 256
      %v1409 = vadd.s32 %v1376, 264
      %v1410 = vadd.s32 %v1376, 272
      %v1411 = vadd.s32 %v1376, 280
      %v1412 = vadd.s32 %v1376, 288
      %v1413 = vadd.s32 %v1376, 296
      %v1414 = vadd.s32 %v1376, 304
      %v1415 = vadd.s32 %v1376, 312
      %v1416 = vadd.s32 %v1376, 320
      %v1417 = vadd.s32 %v1376, 328
      %v1418 = vadd.s32 %v1376, 336
      %v1419 = vadd.s32 %v1376, 344
      %v1420 = vadd.s32 %v1376, 352
      %v1421 = vadd.s32 %v1376, 360
      %v1422 = vadd.s32 %v1376, 368
      %v1423 = vadd.s32 %v1376, 376
      %v1424 = vadd.s32 %v1376, 384
      %v1425 = vadd.s32 %v1376, 392
      %v1426 = vadd.s32 %v1376, 400
      %v1427 = vadd.s32 %v1376, 408
      %v1428 = vadd.s32 %v1376, 416
      %v1429 = vadd.s32 %v1376, 424
      %v1430 = vadd.s32 %v1376, 432
      %v1431 = vadd.s32 %v1376, 440
      %v1432 = vadd.s32 %v1376, 448
      %v1433 = vadd.s32 %v1376, 456
      %v1434 = vadd.s32 %v1376, 464
      %v1435 = vadd.s32 %v1376, 472
      %v1436 = vadd.s32 %v1376, 480
      %v1437 = vadd.s32 %v1376, 488
      %v1438 = vadd.s32 %v1376, 496
      %v1439 = vadd.s32 %v1376, 504
      %v1440 = vstv %s1374
      %v1441 = vadd.s32 %v1440, %v1376
      %v1442 = vadd.s32 %v1440, %v1377
      %v1443 = vadd.s32 %v1440, %v1378
      %v1444 = vadd.s32 %v1440, %v1379
      %v1445 = vadd.s32 %v1440, %v1380
      %v1446 = vadd.s32 %v1440, %v1381
      %v1447 = vadd.s32 %v1440, %v1382
      %v1448 = vadd.s32 %v1440, %v1383
      %v1449 = vadd.s32 %v1440, %v1384
      %v1450 = vadd.s32 %v1440, %v1385
      %v1451 = vadd.s32 %v1440, %v1386
      %v1452 = vadd.s32 %v1440, %v1387
      %v1453 = vadd.s32 %v1440, %v1388
      %v1454 = vadd.s32 %v1440, %v1389
      %v1455 = vadd.s32 %v1440, %v1390
      %v1456 = vadd.s32 %v1440, %v1391
      %v1457 = vadd.s32 %v1440, %v1392
      %v1458 = vadd.s32 %v1440, %v1393
      %v1459 = vadd.s32 %v1440, %v1394
      %v1460 = vadd.s32 %v1440, %v1395
      %v1461 = vadd.s32 %v1440, %v1396
      %v1462 = vadd.s32 %v1440, %v1397
      %v1463 = vadd.s32 %v1440, %v1398
      %v1464 = vadd.s32 %v1440, %v1399
      %v1465 = vadd.s32 %v1440, %v1400
      %v1466 = vadd.s32 %v1440, %v1401
      %v1467 = vadd.s32 %v1440, %v1402
      %v1468 = vadd.s32 %v1440, %v1403
      %v1469 = vadd.s32 %v1440, %v1404
      %v1470 = vadd.s32 %v1440, %v1405
      %v1471 = vadd.s32 %v1440, %v1406
      %v1472 = vadd.s32 %v1440, %v1407
      %v1473 = vadd.s32 %v1440, %v1408
      %v1474 = vadd.s32 %v1440, %v1409
      %v1475 = vadd.s32 %v1440, %v1410
      %v1476 = vadd.s32 %v1440, %v1411
      %v1477 = vadd.s32 %v1440, %v1412
      %v1478 = vadd.s32 %v1440, %v1413
      %v1479 = vadd.s32 %v1440, %v1414
      %v1480 = vadd.s32 %v1440, %v1415
      %v1481 = vadd.s32 %v1440, %v1416
      %v1482 = vadd.s32 %v1440, %v1417
      %v1483 = vadd.s32 %v1440, %v1418
      %v1484 = vadd.s32 %v1440, %v1419
      %v1485 = vadd.s32 %v1440, %v1420
      %v1486 = vadd.s32 %v1440, %v1421
      %v1487 = vadd.s32 %v1440, %v1422
      %v1488 = vadd.s32 %v1440, %v1423
      %v1489 = vadd.s32 %v1440, %v1424
      %v1490 = vadd.s32 %v1440, %v1425
      %v1491 = vadd.s32 %v1440, %v1426
      %v1492 = vadd.s32 %v1440, %v1427
      %v1493 = vadd.s32 %v1440, %v1428
      %v1494 = vadd.s32 %v1440, %v1429
      %v1495 = vadd.s32 %v1440, %v1430
      %v1496 = vadd.s32 %v1440, %v1431
      %v1497 = vadd.s32 %v1440, %v1432
      %v1498 = vadd.s32 %v1440, %v1433
      %v1499 = vadd.s32 %v1440, %v1434
      %v1500 = vadd.s32 %v1440, %v1435
      %v1501 = vadd.s32 %v1440, %v1436
      %v1502 = vadd.s32 %v1440, %v1437
      %v1503 = vadd.s32 %v1440, %v1438
      %v1504 = vadd.s32 %v1440, %v1439
      %vm1505 = vcmp.lt.s32.totalorder %v1441, 16
      %vm1506 = vcmp.lt.s32.totalorder %v1442, 16
      %vm1507 = vcmp.lt.s32.totalorder %v1443, 16
      %vm1508 = vcmp.lt.s32.totalorder %v1444, 16
      %vm1509 = vcmp.lt.s32.totalorder %v1445, 16
      %vm1510 = vcmp.lt.s32.totalorder %v1446, 16
      %vm1511 = vcmp.lt.s32.totalorder %v1447, 16
      %vm1512 = vcmp.lt.s32.totalorder %v1448, 16
      %vm1513 = vcmp.lt.s32.totalorder %v1449, 16
      %vm1514 = vcmp.lt.s32.totalorder %v1450, 16
      %vm1515 = vcmp.lt.s32.totalorder %v1451, 16
      %vm1516 = vcmp.lt.s32.totalorder %v1452, 16
      %vm1517 = vcmp.lt.s32.totalorder %v1453, 16
      %vm1518 = vcmp.lt.s32.totalorder %v1454, 16
      %vm1519 = vcmp.lt.s32.totalorder %v1455, 16
      %vm1520 = vcmp.lt.s32.totalorder %v1456, 16
      %vm1521 = vcmp.lt.s32.totalorder %v1457, 16
      %vm1522 = vcmp.lt.s32.totalorder %v1458, 16
      %vm1523 = vcmp.lt.s32.totalorder %v1459, 16
      %vm1524 = vcmp.lt.s32.totalorder %v1460, 16
      %vm1525 = vcmp.lt.s32.totalorder %v1461, 16
      %vm1526 = vcmp.lt.s32.totalorder %v1462, 16
      %vm1527 = vcmp.lt.s32.totalorder %v1463, 16
      %vm1528 = vcmp.lt.s32.totalorder %v1464, 16
      %vm1529 = vcmp.lt.s32.totalorder %v1465, 16
      %vm1530 = vcmp.lt.s32.totalorder %v1466, 16
      %vm1531 = vcmp.lt.s32.totalorder %v1467, 16
      %vm1532 = vcmp.lt.s32.totalorder %v1468, 16
      %vm1533 = vcmp.lt.s32.totalorder %v1469, 16
      %vm1534 = vcmp.lt.s32.totalorder %v1470, 16
      %vm1535 = vcmp.lt.s32.totalorder %v1471, 16
      %vm1536 = vcmp.lt.s32.totalorder %v1472, 16
      %vm1537 = vcmp.lt.s32.totalorder %v1473, 16
      %vm1538 = vcmp.lt.s32.totalorder %v1474, 16
      %vm1539 = vcmp.lt.s32.totalorder %v1475, 16
      %vm1540 = vcmp.lt.s32.totalorder %v1476, 16
      %vm1541 = vcmp.lt.s32.totalorder %v1477, 16
      %vm1542 = vcmp.lt.s32.totalorder %v1478, 16
      %vm1543 = vcmp.lt.s32.totalorder %v1479, 16
      %vm1544 = vcmp.lt.s32.totalorder %v1480, 16
      %vm1545 = vcmp.lt.s32.totalorder %v1481, 16
      %vm1546 = vcmp.lt.s32.totalorder %v1482, 16
      %vm1547 = vcmp.lt.s32.totalorder %v1483, 16
      %vm1548 = vcmp.lt.s32.totalorder %v1484, 16
      %vm1549 = vcmp.lt.s32.totalorder %v1485, 16
      %vm1550 = vcmp.lt.s32.totalorder %v1486, 16
      %vm1551 = vcmp.lt.s32.totalorder %v1487, 16
      %vm1552 = vcmp.lt.s32.totalorder %v1488, 16
      %vm1553 = vcmp.lt.s32.totalorder %v1489, 16
      %vm1554 = vcmp.lt.s32.totalorder %v1490, 16
      %vm1555 = vcmp.lt.s32.totalorder %v1491, 16
      %vm1556 = vcmp.lt.s32.totalorder %v1492, 16
      %vm1557 = vcmp.lt.s32.totalorder %v1493, 16
      %vm1558 = vcmp.lt.s32.totalorder %v1494, 16
      %vm1559 = vcmp.lt.s32.totalorder %v1495, 16
      %vm1560 = vcmp.lt.s32.totalorder %v1496, 16
      %vm1561 = vcmp.lt.s32.totalorder %v1497, 16
      %vm1562 = vcmp.lt.s32.totalorder %v1498, 16
      %vm1563 = vcmp.lt.s32.totalorder %v1499, 16
      %vm1564 = vcmp.lt.s32.totalorder %v1500, 16
      %vm1565 = vcmp.lt.s32.totalorder %v1501, 16
      %vm1566 = vcmp.lt.s32.totalorder %v1502, 16
      %vm1567 = vcmp.lt.s32.totalorder %v1503, 16
      %vm1568 = vcmp.lt.s32.totalorder %v1504, 16
      %v1569 = vsel %vm1505, %v1246, 0.0
      %v1570 = vsel %vm1506, %v1248, 0.0
      %v1571 = vsel %vm1507, %v1250, 0.0
      %v1572 = vsel %vm1508, %v1252, 0.0
      %v1573 = vsel %vm1509, %v1254, 0.0
      %v1574 = vsel %vm1510, %v1256, 0.0
      %v1575 = vsel %vm1511, %v1258, 0.0
      %v1576 = vsel %vm1512, %v1260, 0.0
      %v1577 = vsel %vm1513, %v1262, 0.0
      %v1578 = vsel %vm1514, %v1264, 0.0
      %v1579 = vsel %vm1515, %v1266, 0.0
      %v1580 = vsel %vm1516, %v1268, 0.0
      %v1581 = vsel %vm1517, %v1270, 0.0
      %v1582 = vsel %vm1518, %v1272, 0.0
      %v1583 = vsel %vm1519, %v1274, 0.0
      %v1584 = vsel %vm1520, %v1276, 0.0
      %v1585 = vsel %vm1521, %v1278, 0.0
      %v1586 = vsel %vm1522, %v1280, 0.0
      %v1587 = vsel %vm1523, %v1282, 0.0
      %v1588 = vsel %vm1524, %v1284, 0.0
      %v1589 = vsel %vm1525, %v1286, 0.0
      %v1590 = vsel %vm1526, %v1288, 0.0
      %v1591 = vsel %vm1527, %v1290, 0.0
      %v1592 = vsel %vm1528, %v1292, 0.0
      %v1593 = vsel %vm1529, %v1294, 0.0
      %v1594 = vsel %vm1530, %v1296, 0.0
      %v1595 = vsel %vm1531, %v1298, 0.0
      %v1596 = vsel %vm1532, %v1300, 0.0
      %v1597 = vsel %vm1533, %v1302, 0.0
      %v1598 = vsel %vm1534, %v1304, 0.0
      %v1599 = vsel %vm1535, %v1306, 0.0
      %v1600 = vsel %vm1536, %v1308, 0.0
      %v1601 = vsel %vm1537, %v1310, 0.0
      %v1602 = vsel %vm1538, %v1312, 0.0
      %v1603 = vsel %vm1539, %v1314, 0.0
      %v1604 = vsel %vm1540, %v1316, 0.0
      %v1605 = vsel %vm1541, %v1318, 0.0
      %v1606 = vsel %vm1542, %v1320, 0.0
      %v1607 = vsel %vm1543, %v1322, 0.0
      %v1608 = vsel %vm1544, %v1324, 0.0
      %v1609 = vsel %vm1545, %v1326, 0.0
      %v1610 = vsel %vm1546, %v1328, 0.0
      %v1611 = vsel %vm1547, %v1330, 0.0
      %v1612 = vsel %vm1548, %v1332, 0.0
      %v1613 = vsel %vm1549, %v1334, 0.0
      %v1614 = vsel %vm1550, %v1336, 0.0
      %v1615 = vsel %vm1551, %v1338, 0.0
      %v1616 = vsel %vm1552, %v1340, 0.0
      %v1617 = vsel %vm1553, %v1342, 0.0
      %v1618 = vsel %vm1554, %v1344, 0.0
      %v1619 = vsel %vm1555, %v1346, 0.0
      %v1620 = vsel %vm1556, %v1348, 0.0
      %v1621 = vsel %vm1557, %v1350, 0.0
      %v1622 = vsel %vm1558, %v1352, 0.0
      %v1623 = vsel %vm1559, %v1354, 0.0
      %v1624 = vsel %vm1560, %v1356, 0.0
      %v1625 = vsel %vm1561, %v1358, 0.0
      %v1626 = vsel %vm1562, %v1360, 0.0
      %v1627 = vsel %vm1563, %v1362, 0.0
      %v1628 = vsel %vm1564, %v1364, 0.0
      %v1629 = vsel %vm1565, %v1366, 0.0
      %v1630 = vsel %vm1566, %v1368, 0.0
      %v1631 = vsel %vm1567, %v1370, 0.0
      %v1632 = vsel %vm1568, %v1372, 0.0
      %v1633 = vsel %vm1505, %v925, 0.0
      %v1634 = vsel %vm1506, %v926, 0.0
      %v1635 = vsel %vm1507, %v927, 0.0
      %v1636 = vsel %vm1508, %v928, 0.0
      %v1637 = vsel %vm1509, %v929, 0.0
      %v1638 = vsel %vm1510, %v930, 0.0
      %v1639 = vsel %vm1511, %v931, 0.0
      %v1640 = vsel %vm1512, %v932, 0.0
      %v1641 = vsel %vm1513, %v933, 0.0
      %v1642 = vsel %vm1514, %v934, 0.0
      %v1643 = vsel %vm1515, %v935, 0.0
      %v1644 = vsel %vm1516, %v936, 0.0
      %v1645 = vsel %vm1517, %v937, 0.0
      %v1646 = vsel %vm1518, %v938, 0.0
      %v1647 = vsel %vm1519, %v939, 0.0
      %v1648 = vsel %vm1520, %v940, 0.0
      %v1649 = vsel %vm1521, %v941, 0.0
      %v1650 = vsel %vm1522, %v942, 0.0
      %v1651 = vsel %vm1523, %v943, 0.0
      %v1652 = vsel %vm1524, %v944, 0.0
      %v1653 = vsel %vm1525, %v945, 0.0
      %v1654 = vsel %vm1526, %v946, 0.0
      %v1655 = vsel %vm1527, %v947, 0.0
      %v1656 = vsel %vm1528, %v948, 0.0
      %v1657 = vsel %vm1529, %v949, 0.0
      %v1658 = vsel %vm1530, %v950, 0.0
      %v1659 = vsel %vm1531, %v951, 0.0
      %v1660 = vsel %vm1532, %v952, 0.0
      %v1661 = vsel %vm1533, %v953, 0.0
      %v1662 = vsel %vm1534, %v954, 0.0
      %v1663 = vsel %vm1535, %v955, 0.0
      %v1664 = vsel %vm1536, %v956, 0.0
      %v1665 = vsel %vm1537, %v957, 0.0
      %v1666 = vsel %vm1538, %v958, 0.0
      %v1667 = vsel %vm1539, %v959, 0.0
      %v1668 = vsel %vm1540, %v960, 0.0
      %v1669 = vsel %vm1541, %v961, 0.0
      %v1670 = vsel %vm1542, %v962, 0.0
      %v1671 = vsel %vm1543, %v963, 0.0
      %v1672 = vsel %vm1544, %v964, 0.0
      %v1673 = vsel %vm1545, %v965, 0.0
      %v1674 = vsel %vm1546, %v966, 0.0
      %v1675 = vsel %vm1547, %v967, 0.0
      %v1676 = vsel %vm1548, %v968, 0.0
      %v1677 = vsel %vm1549, %v969, 0.0
      %v1678 = vsel %vm1550, %v970, 0.0
      %v1679 = vsel %vm1551, %v971, 0.0
      %v1680 = vsel %vm1552, %v972, 0.0
      %v1681 = vsel %vm1553, %v973, 0.0
      %v1682 = vsel %vm1554, %v974, 0.0
      %v1683 = vsel %vm1555, %v975, 0.0
      %v1684 = vsel %vm1556, %v976, 0.0
      %v1685 = vsel %vm1557, %v977, 0.0
      %v1686 = vsel %vm1558, %v978, 0.0
      %v1687 = vsel %vm1559, %v979, 0.0
      %v1688 = vsel %vm1560, %v980, 0.0
      %v1689 = vsel %vm1561, %v981, 0.0
      %v1690 = vsel %vm1562, %v982, 0.0
      %v1691 = vsel %vm1563, %v983, 0.0
      %v1692 = vsel %vm1564, %v984, 0.0
      %v1693 = vsel %vm1565, %v985, 0.0
      %v1694 = vsel %vm1566, %v986, 0.0
      %v1695 = vsel %vm1567, %v987, 0.0
      %v1696 = vsel %vm1568, %v988, 0.0
      %v1697 = vmul.f32 %v1569, %v1633
      %v1698 = vmul.f32 %v1570, %v1634
      %v1699 = vmul.f32 %v1571, %v1635
      %v1700 = vmul.f32 %v1572, %v1636
      %v1701 = vmul.f32 %v1573, %v1637
      %v1702 = vmul.f32 %v1574, %v1638
      %v1703 = vmul.f32 %v1575, %v1639
      %v1704 = vmul.f32 %v1576, %v1640
      %v1705 = vmul.f32 %v1577, %v1641
      %v1706 = vmul.f32 %v1578, %v1642
      %v1707 = vmul.f32 %v1579, %v1643
      %v1708 = vmul.f32 %v1580, %v1644
      %v1709 = vmul.f32 %v1581, %v1645
      %v1710 = vmul.f32 %v1582, %v1646
      %v1711 = vmul.f32 %v1583, %v1647
      %v1712 = vmul.f32 %v1584, %v1648
      %v1713 = vmul.f32 %v1585, %v1649
      %v1714 = vmul.f32 %v1586, %v1650
      %v1715 = vmul.f32 %v1587, %v1651
      %v1716 = vmul.f32 %v1588, %v1652
      %v1717 = vmul.f32 %v1589, %v1653
      %v1718 = vmul.f32 %v1590, %v1654
      %v1719 = vmul.f32 %v1591, %v1655
      %v1720 = vmul.f32 %v1592, %v1656
      %v1721 = vmul.f32 %v1593, %v1657
      %v1722 = vmul.f32 %v1594, %v1658
      %v1723 = vmul.f32 %v1595, %v1659
      %v1724 = vmul.f32 %v1596, %v1660
      %v1725 = vmul.f32 %v1597, %v1661
      %v1726 = vmul.f32 %v1598, %v1662
      %v1727 = vmul.f32 %v1599, %v1663
      %v1728 = vmul.f32 %v1600, %v1664
      %v1729 = vmul.f32 %v1601, %v1665
      %v1730 = vmul.f32 %v1602, %v1666
      %v1731 = vmul.f32 %v1603, %v1667
      %v1732 = vmul.f32 %v1604, %v1668
      %v1733 = vmul.f32 %v1605, %v1669
      %v1734 = vmul.f32 %v1606, %v1670
      %v1735 = vmul.f32 %v1607, %v1671
      %v1736 = vmul.f32 %v1608, %v1672
      %v1737 = vmul.f32 %v1609, %v1673
      %v1738 = vmul.f32 %v1610, %v1674
      %v1739 = vmul.f32 %v1611, %v1675
      %v1740 = vmul.f32 %v1612, %v1676
      %v1741 = vmul.f32 %v1613, %v1677
      %v1742 = vmul.f32 %v1614, %v1678
      %v1743 = vmul.f32 %v1615, %v1679
      %v1744 = vmul.f32 %v1616, %v1680
      %v1745 = vmul.f32 %v1617, %v1681
      %v1746 = vmul.f32 %v1618, %v1682
      %v1747 = vmul.f32 %v1619, %v1683
      %v1748 = vmul.f32 %v1620, %v1684
      %v1749 = vmul.f32 %v1621, %v1685
      %v1750 = vmul.f32 %v1622, %v1686
      %v1751 = vmul.f32 %v1623, %v1687
      %v1752 = vmul.f32 %v1624, %v1688
      %v1753 = vmul.f32 %v1625, %v1689
      %v1754 = vmul.f32 %v1626, %v1690
      %v1755 = vmul.f32 %v1627, %v1691
      %v1756 = vmul.f32 %v1628, %v1692
      %v1757 = vmul.f32 %v1629, %v1693
      %v1758 = vmul.f32 %v1630, %v1694
      %v1759 = vmul.f32 %v1631, %v1695
      %v1760 = vmul.f32 %v1632, %v1696
      %v1761 = vadd.f32 %v1697, %v1698
      %v1762 = vadd.f32 %v1761, %v1699
      %v1763 = vadd.f32 %v1762, %v1700
      %v1764 = vadd.f32 %v1763, %v1701
      %v1765 = vadd.f32 %v1764, %v1702
      %v1766 = vadd.f32 %v1765, %v1703
      %v1767 = vadd.f32 %v1766, %v1704
      %v1768 = vadd.f32 %v1767, %v1705
      %v1769 = vadd.f32 %v1768, %v1706
      %v1770 = vadd.f32 %v1769, %v1707
      %v1771 = vadd.f32 %v1770, %v1708
      %v1772 = vadd.f32 %v1771, %v1709
      %v1773 = vadd.f32 %v1772, %v1710
      %v1774 = vadd.f32 %v1773, %v1711
      %v1775 = vadd.f32 %v1774, %v1712
      %v1776 = vadd.f32 %v1775, %v1713
      %v1777 = vadd.f32 %v1776, %v1714
      %v1778 = vadd.f32 %v1777, %v1715
      %v1779 = vadd.f32 %v1778, %v1716
      %v1780 = vadd.f32 %v1779, %v1717
      %v1781 = vadd.f32 %v1780, %v1718
      %v1782 = vadd.f32 %v1781, %v1719
      %v1783 = vadd.f32 %v1782, %v1720
      %v1784 = vadd.f32 %v1783, %v1721
      %v1785 = vadd.f32 %v1784, %v1722
      %v1786 = vadd.f32 %v1785, %v1723
      %v1787 = vadd.f32 %v1786, %v1724
      %v1788 = vadd.f32 %v1787, %v1725
      %v1789 = vadd.f32 %v1788, %v1726
      %v1790 = vadd.f32 %v1789, %v1727
      %v1791 = vadd.f32 %v1790, %v1728
      %v1792 = vadd.f32 %v1791, %v1729
      %v1793 = vadd.f32 %v1792, %v1730
      %v1794 = vadd.f32 %v1793, %v1731
      %v1795 = vadd.f32 %v1794, %v1732
      %v1796 = vadd.f32 %v1795, %v1733
      %v1797 = vadd.f32 %v1796, %v1734
      %v1798 = vadd.f32 %v1797, %v1735
      %v1799 = vadd.f32 %v1798, %v1736
      %v1800 = vadd.f32 %v1799, %v1737
      %v1801 = vadd.f32 %v1800, %v1738
      %v1802 = vadd.f32 %v1801, %v1739
      %v1803 = vadd.f32 %v1802, %v1740
      %v1804 = vadd.f32 %v1803, %v1741
      %v1805 = vadd.f32 %v1804, %v1742
      %v1806 = vadd.f32 %v1805, %v1743
      %v1807 = vadd.f32 %v1806, %v1744
      %v1808 = vadd.f32 %v1807, %v1745
      %v1809 = vadd.f32 %v1808, %v1746
      %v1810 = vadd.f32 %v1809, %v1747
      %v1811 = vadd.f32 %v1810, %v1748
      %v1812 = vadd.f32 %v1811, %v1749
      %v1813 = vadd.f32 %v1812, %v1750
      %v1814 = vadd.f32 %v1813, %v1751
      %v1815 = vadd.f32 %v1814, %v1752
      %v1816 = vadd.f32 %v1815, %v1753
      %v1817 = vadd.f32 %v1816, %v1754
      %v1818 = vadd.f32 %v1817, %v1755
      %v1819 = vadd.f32 %v1818, %v1756
      %v1820 = vadd.f32 %v1819, %v1757
      %v1821 = vadd.f32 %v1820, %v1758
      %v1822 = vadd.f32 %v1821, %v1759
      %v1823 = vadd.f32 %v1822, %v1760
      %v1824 = vadd.f32 %v859, %v1823
      %v1825 = vadd.f32 %v1569, %v1633
      %v1826 = vadd.f32 %v1570, %v1634
      %v1827 = vadd.f32 %v1571, %v1635
      %v1828 = vadd.f32 %v1572, %v1636
      %v1829 = vadd.f32 %v1573, %v1637
      %v1830 = vadd.f32 %v1574, %v1638
      %v1831 = vadd.f32 %v1575, %v1639
      %v1832 = vadd.f32 %v1576, %v1640
      %v1833 = vadd.f32 %v1577, %v1641
      %v1834 = vadd.f32 %v1578, %v1642
      %v1835 = vadd.f32 %v1579, %v1643
      %v1836 = vadd.f32 %v1580, %v1644
      %v1837 = vadd.f32 %v1581, %v1645
      %v1838 = vadd.f32 %v1582, %v1646
      %v1839 = vadd.f32 %v1583, %v1647
      %v1840 = vadd.f32 %v1584, %v1648
      %v1841 = vadd.f32 %v1585, %v1649
      %v1842 = vadd.f32 %v1586, %v1650
      %v1843 = vadd.f32 %v1587, %v1651
      %v1844 = vadd.f32 %v1588, %v1652
      %v1845 = vadd.f32 %v1589, %v1653
      %v1846 = vadd.f32 %v1590, %v1654
      %v1847 = vadd.f32 %v1591, %v1655
      %v1848 = vadd.f32 %v1592, %v1656
      %v1849 = vadd.f32 %v1593, %v1657
      %v1850 = vadd.f32 %v1594, %v1658
      %v1851 = vadd.f32 %v1595, %v1659
      %v1852 = vadd.f32 %v1596, %v1660
      %v1853 = vadd.f32 %v1597, %v1661
      %v1854 = vadd.f32 %v1598, %v1662
      %v1855 = vadd.f32 %v1599, %v1663
      %v1856 = vadd.f32 %v1600, %v1664
      %v1857 = vadd.f32 %v1601, %v1665
      %v1858 = vadd.f32 %v1602, %v1666
      %v1859 = vadd.f32 %v1603, %v1667
      %v1860 = vadd.f32 %v1604, %v1668
      %v1861 = vadd.f32 %v1605, %v1669
      %v1862 = vadd.f32 %v1606, %v1670
      %v1863 = vadd.f32 %v1607, %v1671
      %v1864 = vadd.f32 %v1608, %v1672
      %v1865 = vadd.f32 %v1609, %v1673
      %v1866 = vadd.f32 %v1610, %v1674
      %v1867 = vadd.f32 %v1611, %v1675
      %v1868 = vadd.f32 %v1612, %v1676
      %v1869 = vadd.f32 %v1613, %v1677
      %v1870 = vadd.f32 %v1614, %v1678
      %v1871 = vadd.f32 %v1615, %v1679
      %v1872 = vadd.f32 %v1616, %v1680
      %v1873 = vadd.f32 %v1617, %v1681
      %v1874 = vadd.f32 %v1618, %v1682
      %v1875 = vadd.f32 %v1619, %v1683
      %v1876 = vadd.f32 %v1620, %v1684
      %v1877 = vadd.f32 %v1621, %v1685
      %v1878 = vadd.f32 %v1622, %v1686
      %v1879 = vadd.f32 %v1623, %v1687
      %v1880 = vadd.f32 %v1624, %v1688
      %v1881 = vadd.f32 %v1625, %v1689
      %v1882 = vadd.f32 %v1626, %v1690
      %v1883 = vadd.f32 %v1627, %v1691
      %v1884 = vadd.f32 %v1628, %v1692
      %v1885 = vadd.f32 %v1629, %v1693
      %v1886 = vadd.f32 %v1630, %v1694
      %v1887 = vadd.f32 %v1631, %v1695
      %v1888 = vadd.f32 %v1632, %v1696
      %v1889 = vadd.f32 %v1825, %v1826
      %v1890 = vadd.f32 %v1889, %v1827
      %v1891 = vadd.f32 %v1890, %v1828
      %v1892 = vadd.f32 %v1891, %v1829
      %v1893 = vadd.f32 %v1892, %v1830
      %v1894 = vadd.f32 %v1893, %v1831
      %v1895 = vadd.f32 %v1894, %v1832
      %v1896 = vadd.f32 %v1895, %v1833
      %v1897 = vadd.f32 %v1896, %v1834
      %v1898 = vadd.f32 %v1897, %v1835
      %v1899 = vadd.f32 %v1898, %v1836
      %v1900 = vadd.f32 %v1899, %v1837
      %v1901 = vadd.f32 %v1900, %v1838
      %v1902 = vadd.f32 %v1901, %v1839
      %v1903 = vadd.f32 %v1902, %v1840
      %v1904 = vadd.f32 %v1903, %v1841
      %v1905 = vadd.f32 %v1904, %v1842
      %v1906 = vadd.f32 %v1905, %v1843
      %v1907 = vadd.f32 %v1906, %v1844
      %v1908 = vadd.f32 %v1907, %v1845
      %v1909 = vadd.f32 %v1908, %v1846
      %v1910 = vadd.f32 %v1909, %v1847
      %v1911 = vadd.f32 %v1910, %v1848
      %v1912 = vadd.f32 %v1911, %v1849
      %v1913 = vadd.f32 %v1912, %v1850
      %v1914 = vadd.f32 %v1913, %v1851
      %v1915 = vadd.f32 %v1914, %v1852
      %v1916 = vadd.f32 %v1915, %v1853
      %v1917 = vadd.f32 %v1916, %v1854
      %v1918 = vadd.f32 %v1917, %v1855
      %v1919 = vadd.f32 %v1918, %v1856
      %v1920 = vadd.f32 %v1919, %v1857
      %v1921 = vadd.f32 %v1920, %v1858
      %v1922 = vadd.f32 %v1921, %v1859
      %v1923 = vadd.f32 %v1922, %v1860
      %v1924 = vadd.f32 %v1923, %v1861
      %v1925 = vadd.f32 %v1924, %v1862
      %v1926 = vadd.f32 %v1925, %v1863
      %v1927 = vadd.f32 %v1926, %v1864
      %v1928 = vadd.f32 %v1927, %v1865
      %v1929 = vadd.f32 %v1928, %v1866
      %v1930 = vadd.f32 %v1929, %v1867
      %v1931 = vadd.f32 %v1930, %v1868
      %v1932 = vadd.f32 %v1931, %v1869
      %v1933 = vadd.f32 %v1932, %v1870
      %v1934 = vadd.f32 %v1933, %v1871
      %v1935 = vadd.f32 %v1934, %v1872
      %v1936 = vadd.f32 %v1935, %v1873
      %v1937 = vadd.f32 %v1936, %v1874
      %v1938 = vadd.f32 %v1937, %v1875
      %v1939 = vadd.f32 %v1938, %v1876
      %v1940 = vadd.f32 %v1939, %v1877
      %v1941 = vadd.f32 %v1940, %v1878
      %v1942 = vadd.f32 %v1941, %v1879
      %v1943 = vadd.f32 %v1942, %v1880
      %v1944 = vadd.f32 %v1943, %v1881
      %v1945 = vadd.f32 %v1944, %v1882
      %v1946 = vadd.f32 %v1945, %v1883
      %v1947 = vadd.f32 %v1946, %v1884
      %v1948 = vadd.f32 %v1947, %v1885
      %v1949 = vadd.f32 %v1948, %v1886
      %v1950 = vadd.f32 %v1949, %v1887
      %v1951 = vadd.f32 %v1950, %v1888
      %v1952 = vadd.f32 %v860, %v1951
      %1953 = vst [vmem:[#allocation2] sm:$0xff] %v1824
      %1954 = vst [vmem:[#allocation3] sm:$0xff] %v1952
    $region29: #{tpu_custom_call.1} parent=1 // pred_fallthru
      _
    // Predicated region
    $region30: #{tpu_custom_call.1} parent=1 // pred_check
      %p1955 = pneg %p72
    $region31: #{tpu_custom_call.1} parent=1 // pred_check_branch
      %1957 = sbr.rel (%p1955) target = $region33
    $region32: #{tpu_custom_call.1} parent=1 // pred_region
      %v1958 = vld [vmem:[#allocation2] sm:$0xff]
      %1959 = vadd.xlane.f32.xlu0 %v1958
      %v1960 = vpop.xlane.xlu0 %1959
      %v1961 = vrot.slane %v1960, 4
      %v1962 = vadd.f32 %v1960, %v1961
      %v1963 = vrot.slane %v1962, 2
      %v1964 = vadd.f32 %v1962, %v1963
      %v1965 = vrot.slane %v1964, 1
      %v1966 = vadd.f32 %v1964, %v1965
      %s1967 = vtos %v1966
      %s1968 = scalar_lea.smem [#allocation9], 0
      %1969 = sst [smem:[%s1968]] %s1967
      %v1970 = vld [vmem:[#allocation3] sm:$0xff]
      %1971 = vadd.xlane.f32.xlu0 %v1970
      %v1972 = vpop.xlane.xlu0 %1971
      %v1973 = vrot.slane %v1972, 4
      %v1974 = vadd.f32 %v1972, %v1973
      %v1975 = vrot.slane %v1974, 2
      %v1976 = vadd.f32 %v1974, %v1975
      %v1977 = vrot.slane %v1976, 1
      %v1978 = vadd.f32 %v1976, %v1977
      %s1979 = vtos %v1978
      %s1980 = scalar_lea.smem [#allocation9], 1
      %1981 = sst [smem:[%s1980]] %s1979
    $region33: #{tpu_custom_call.1} parent=1 // pred_fallthru
      _
    // Predicated region
    $region34: #{tpu_custom_call.1} parent=1 // pred_check
      _
    $region35: #{tpu_custom_call.1} parent=1 // pred_check_branch
      %1983 = sbr.rel (0) target = $region37
    $region36: #{tpu_custom_call.1} parent=1 // pred_region
      %s1985 = ssub.s32 16, 16
      %1986 = vsyncadd [#allocation6], %s1985
      %1989 = dma.smem_to_hbm [#allocation9], 16, %s2, [#allocation6]
    $region37: #{tpu_custom_call.1} parent=1 // pred_fallthru
      _
    // Predicated region
    $region38: #{tpu_custom_call.1} parent=1 // pred_check
      _
    $region39: #{tpu_custom_call.1} parent=1 // pred_check_branch
      %1991 = sbr.rel (0) target = $region41
    $region40: #{tpu_custom_call.1} parent=1 // pred_region
      %1992 = dma.done [#allocation6], 16
    $region41: #{tpu_custom_call.1} parent=1 // pred_fallthru
      _
    %1993 = sfence
    %1994 = vsyncpa [#allocation5], 1
    %1995 = vsyncpa [#allocation8], 1
    %1996 = vsyncpa [#allocation6], 1

</llo_original>
